<compile_context>
chip_gen: v7x
topology: tpu7x:2x2x1
jax: 0.10.0
libtpu: 0.0.40
codegen_flags: <defaults>
</compile_context>

<pallas_src>
import functools

import jax
import jax.numpy as jnp
from jax.experimental import pallas as pl
from jax.experimental.pallas import tpu as pltpu


def _round_up(x, m):
    return (x + m - 1) // m * m


def _distill_distance_kernel(
    ib_ref, jb_ref,                                  # scalar prefetch (SMEM): block tables
    s_i_ref, s_j_ref, t_i_ref, t_j_ref,              # embedding blocks
    sq_col_ref, sq_row_ref,                          # precomputed squared norms
    out_ref,                                         # (1, 8, 128) f32 per-pair partial
    *, alpha, eps, n_valid, n_total, tm, tn, n_blocks, mxu_dtype,
):
    p = pl.program_id(0)
    i_blk = ib_ref[p]
    j_blk = jb_ref[p]

    # Gram blocks on the MXU: contract the last (lane) dim of BOTH operands (no
    # transposes).  The -2 factor is folded into the smaller j-side operand
    # (2*x is exact in bf16/f32), so the epilogue computes sq_i + sq_j - gram.
    dims = (((1,), (1,)), ((), ()))

    def gram(a_ref, b_ref):
        a = a_ref[...]
        b = b_ref[...]
        if mxu_dtype is not None:                    # optional bf16 MXU fast path
            a = a.astype(mxu_dtype)
            b = b.astype(mxu_dtype)
        return jax.lax.dot_general(a, b * 2.0, dims,
                                   preferred_element_type=jnp.float32)

    gram_s = gram(s_i_ref, s_j_ref)
    gram_t = gram(t_i_ref, t_j_ref)

    # Pre-computed squared norms: column form for the i side, lane-major row
    # form for the j side (no transpose inside the kernel).
    s_sq_i = sq_col_ref[:, 0:1]        # (TM, 1) f32
    t_sq_i = sq_col_ref[:, 1:2]        # (TM, 1) f32
    s_sq_j = sq_row_ref[0:1, :]        # (1, TN) f32
    t_sq_j = sq_row_ref[1:2, :]        # (1, TN) f32

    d_s = jnp.sqrt(jnp.maximum(s_sq_i + s_sq_j - gram_s, eps))
    d_t = jnp.sqrt(jnp.maximum(t_sq_i + t_sq_j - gram_t, eps))
    if alpha != 1.0:                   # trace-time constant: skip mul when alpha == 1
        d_t = alpha * d_t

    diff = d_s - d_t
    adiff = jnp.abs(diff)
    # F.smooth_l1_loss with beta = 1: 0.5*x^2 if |x| < 1 else |x| - 0.5
    sl1 = jnp.where(adiff < 1.0, 0.5 * diff * diff, adiff - 0.5)

    # Off-diagonal (i < j) blocks stand in for their mirrored (j, i) twin.
    weight = jnp.where(i_blk == j_blk, jnp.float32(1.0), jnp.float32(2.0))

    def reduce_to_partial(x):
        # (TM, TN) -> (8, 128) using only sublane-group / 128-lane-chunk VPU
        # adds; the single full cross-lane reduce happens once, in the wrapper.
        y = x.reshape(tm // 8, 8, tn).sum(axis=0)    # (8, TN)
        acc = y[:, 0:128]
        for c in range(1, tn // 128):
            acc = acc + y[:, c * 128:(c + 1) * 128]
        return acc

    padded = n_total != n_valid        # python bool (trace-time)
    last = n_blocks - 1
    needs_mask = i_blk == j_blk
    if padded:
        needs_mask = needs_mask | (i_blk == last) | (j_blk == last)

    @pl.when(needs_mask)
    def _masked():
        # Diagonal zeroing (pdist diag := 0 -> smooth-L1 = 0 there) fused with
        # the padded-batch validity mask; only paid on diagonal/boundary blocks.
        row = i_blk * tm + jax.lax.broadcasted_iota(jnp.int32, (tm, tn), 0)
        col = j_blk * tn + jax.lax.broadcasted_iota(jnp.int32, (tm, tn), 1)
        keep = row != col
        if padded:
            keep = keep & (row < n_valid) & (col < n_valid)
        out_ref[0] = weight * reduce_to_partial(jnp.where(keep, sl1, 0.0))

    @pl.when(jnp.logical_not(needs_mask))
    def _interior():
        out_ref[0] = weight * reduce_to_partial(sl1)


def distill_distance(student, teacher, *, alpha=1.0, eps=1e-12, max_tile=256,
                     mxu_dtype=None):
    """student: (N, Ds), teacher: (N, Dt) -> scalar f32 loss (forward only)."""
    n = student.shape[0]
    assert teacher.shape[0] == n, "student/teacher batch sizes must match"

    # Lane-dense feature padding (zero features do not change distances).
    d_s_pad = _round_up(student.shape[1], 128)
    d_t_pad = _round_up(teacher.shape[1], 128)

    # Batch tiling: lane-dense (multiple-of-128) tiles so the in-kernel partial
    # reduction stays on aligned (8, 128) chunks.
    max_tile = max(128, _round_up(max_tile, 128))
    tile = min(max_tile, _round_up(n, 128))
    n_pad = _round_up(n, tile)
    n_blocks = n_pad // tile

    def pad(e, d_pad):
        return jnp.pad(e, ((0, n_pad - n), (0, d_pad - e.shape[1])))

    s = pad(student, d_s_pad)
    t = pad(teacher, d_t_pad)

    # Squared row norms, computed once in f32 in the wrapper and handed to the
    # kernel in both column (N, 2) and lane-major row (2, N) layouts.
    s_sq = jnp.sum(s.astype(jnp.float32) ** 2, axis=1)
    t_sq = jnp.sum(t.astype(jnp.float32) ** 2, axis=1)
    sq_col = jnp.stack([s_sq, t_sq], axis=1)        # (n_pad, 2) f32
    sq_row = jnp.stack([s_sq, t_sq], axis=0)        # (2, n_pad) f32

    # Upper-triangle (i <= j) block-pair table, scalar-prefetched into SMEM.
    pairs_i, pairs_j = [], []
    for i in range(n_blocks):
        for j in range(i, n_blocks):
            pairs_i.append(i)
            pairs_j.append(j)
    n_pairs = len(pairs_i)
    ib_tab = jnp.asarray(pairs_i, dtype=jnp.int32)
    jb_tab = jnp.asarray(pairs_j, dtype=jnp.int32)

    itemsize = jnp.dtype(student.dtype).itemsize

    # VMEM budget: double-buffered embedding blocks + f32 tile temporaries,
    # with a generation-aware ceiling (v7x has 64 MiB physical VMEM per TC).
    block_in_bytes = (2 * tile * (d_s_pad + d_t_pad) * itemsize
                      + 4 * tile * 4 + 8 * 128 * 4)
    tmp_bytes = 12 * tile * tile * 4
    need = 2 * block_in_bytes + tmp_bytes + (2 << 20)
    try:
        phys_vmem = pltpu.get_tpu_info().vmem_capacity_bytes
    except Exception:
        phys_vmem = 64 << 20                         # conservative (v7x per-TC)
    ceiling = max(16 << 20, min(phys_vmem - (16 << 20), 100 << 20))
    vmem_limit = int(min(max(need, 32 << 20), ceiling))

    cost = pl.CostEstimate(
        flops=n_pairs * tile * tile * (2 * (d_s_pad + d_t_pad) + 16),
        transcendentals=2 * n_pairs * tile * tile,
        bytes_accessed=(n_pairs * 2 * tile * (d_s_pad + d_t_pad) * itemsize
                        + n_pairs * 8 * 128 * 4),
    )

    kernel = functools.partial(
        _distill_distance_kernel,
        alpha=float(alpha), eps=float(eps),
        n_valid=n, n_total=n_pad, tm=tile, tn=tile, n_blocks=n_blocks,
        mxu_dtype=mxu_dtype,
    )

    # TODO(synk): feature-dim (K) tiling for very wide embeddings under v7x's
    # 64 MiB VMEM, pl.Buffered(3) on the j-side specs for v5e DMA hiding, and
    # an epilogue strip-mine for tiles > 256 are left out; not needed at these
    # block sizes.
    partials = pl.pallas_call(
        kernel,
        out_shape=jax.ShapeDtypeStruct((n_pairs, 8, 128), jnp.float32),
        grid_spec=pltpu.PrefetchScalarGridSpec(
            num_scalar_prefetch=2,
            grid=(n_pairs,),
            in_specs=[
                pl.BlockSpec((tile, d_s_pad), lambda p, it, jt: (it[p], 0)),  # student i-rows
                pl.BlockSpec((tile, d_s_pad), lambda p, it, jt: (jt[p], 0)),  # student j-rows
                pl.BlockSpec((tile, d_t_pad), lambda p, it, jt: (it[p], 0)),  # teacher i-rows
                pl.BlockSpec((tile, d_t_pad), lambda p, it, jt: (jt[p], 0)),  # teacher j-rows
                pl.BlockSpec((tile, 2), lambda p, it, jt: (it[p], 0)),        # norms, column form
                pl.BlockSpec((2, tile), lambda p, it, jt: (0, jt[p])),        # norms, row form
            ],
            out_specs=pl.BlockSpec((1, 8, 128), lambda p, it, jt: (p, 0, 0)),
        ),
        compiler_params=pltpu.CompilerParams(
            dimension_semantics=("parallel",),       # per-pair outputs -> race-free megacore
            vmem_limit_bytes=vmem_limit,
        ),
        cost_estimate=cost,
    )(ib_tab, jb_tab, s, s, t, t, sq_col, sq_row)

    return jnp.sum(partials) * jnp.float32(1.0 / (n * n))


def _reference(student, teacher, alpha=1.0, eps=1e-12):
    """Pure-JAX reference mirroring the PyTorch forward."""
    def pdist(e):
        sq = jnp.sum(e * e, axis=1)
        prod = jnp.dot(e, e.T, precision=jax.lax.Precision.HIGHEST)
        d2 = jnp.maximum(sq[:, None] + sq[None, :] - 2.0 * prod, eps)
        d = jnp.sqrt(d2)
        m = e.shape[0]
        return d.at[jnp.arange(m), jnp.arange(m)].set(0.0)

    d = pdist(student.astype(jnp.float32))
    t_d = pdist(teacher.astype(jnp.float32))
    diff = d - alpha * t_d
    a = jnp.abs(diff)
    sl1 = jnp.where(a < 1.0, 0.5 * diff * diff, a - 0.5)
    return jnp.mean(sl1)


if __name__ == "__main__":
    key = jax.random.PRNGKey(0)
    k1, k2, k3, k4 = jax.random.split(key, 4)

    # Small embedding batch consistent with the module (N embeddings, D features).
    N, D_STUDENT, D_TEACHER = 8, 32, 64
    student = jax.random.normal(k1, (N, D_STUDENT), dtype=jnp.float32)
    teacher = jax.random.normal(k2, (N, D_TEACHER), dtype=jnp.float32)

    loss = jax.block_until_ready(distill_distance(student, teacher, alpha=1.0))
    ref = _reference(student, teacher, alpha=1.0)
    assert jnp.isfinite(loss), "loss is not finite"
    assert jnp.allclose(loss, ref, rtol=1e-5, atol=1e-5), (loss, ref)

    # Non-unit alpha plus a batch exercising the triangular pair grid, batch
    # padding, boundary masking, and the 2x off-diagonal weighting.
    N2 = 300
    student2 = jax.random.normal(k3, (N2, D_STUDENT), dtype=jnp.float32)
    teacher2 = jax.random.normal(k4, (N2, D_TEACHER), dtype=jnp.float32)
    loss2 = jax.block_until_ready(distill_distance(student2, teacher2, alpha=0.5))
    ref2 = _reference(student2, teacher2, alpha=0.5)
    assert jnp.isfinite(loss2), "loss2 is not finite"
    assert jnp.allclose(loss2, ref2, rtol=1e-4, atol=1e-4), (loss2, ref2)

    # Smaller tile on the same data: 3x3 block triangle -> exercises the
    # unmasked interior fast path (weight 2, no iota/select) as well.
    loss3 = jax.block_until_ready(
        distill_distance(student2, teacher2, alpha=0.5, max_tile=128))
    assert jnp.isfinite(loss3), "loss3 is not finite"
    assert jnp.allclose(loss3, ref2, rtol=1e-4, atol=1e-4), (loss3, ref2)

    print("KERNEL_OK")
</pallas_src>

<mosaic_0001>
module attributes {stable_mosaic.version = 11 : i64} {
  func.func @_distill_distance_kernel(%arg0: i32, %arg1: memref<1xi32, #tpu.memory_space<smem>>, %arg2: memref<1xi32, #tpu.memory_space<smem>>, %arg3: memref<128x128xf32, #tpu.memory_space<vmem>>, %arg4: memref<128x128xf32, #tpu.memory_space<vmem>>, %arg5: memref<128x128xf32, #tpu.memory_space<vmem>>, %arg6: memref<128x128xf32, #tpu.memory_space<vmem>>, %arg7: memref<128x2xf32, #tpu.memory_space<vmem>>, %arg8: memref<2x128xf32, #tpu.memory_space<vmem>>, %arg9: memref<1x8x128xf32, #tpu.memory_space<vmem>>) attributes {dimension_semantics = [#tpu.dimension_semantics<parallel>], iteration_bounds = array<i64: 1>, scalar_prefetch = 2 : i64, scratch_operands = 0 : i64, tpu.core_type = #tpu.core_type<tc>, window_params = [{transform_indices = @transform_0, window_bounds = array<i64: 128, 128>}, {transform_indices = @transform_1, window_bounds = array<i64: 128, 128>}, {transform_indices = @transform_2, window_bounds = array<i64: 128, 128>}, {transform_indices = @transform_3, window_bounds = array<i64: 128, 128>}, {transform_indices = @transform_4, window_bounds = array<i64: 128, 2>}, {transform_indices = @transform_5, window_bounds = array<i64: 2, 128>}, {transform_indices = @transform_6, window_bounds = array<i64: 1, 8, 128>}]} {
    %0 = arith.index_cast %arg0 : i32 to index
    %1 = memref.load %arg1[%0] : memref<1xi32, #tpu.memory_space<smem>>
    %2 = arith.index_cast %arg0 : i32 to index
    %3 = memref.load %arg2[%2] : memref<1xi32, #tpu.memory_space<smem>>
    %c0 = arith.constant 0 : index
    %c0_0 = arith.constant 0 : index
    %4 = vector.load %arg3[%c0, %c0_0] : memref<128x128xf32, #tpu.memory_space<vmem>>, vector<128x128xf32>
    %c0_1 = arith.constant 0 : index
    %c0_2 = arith.constant 0 : index
    %5 = vector.load %arg4[%c0_1, %c0_2] : memref<128x128xf32, #tpu.memory_space<vmem>>, vector<128x128xf32>
    %cst = arith.constant 2.000000e+00 : f32
    %6 = vector.broadcast %cst : f32 to vector<128x128xf32>
    %7 = arith.mulf %5, %6 : vector<128x128xf32>
    %cst_3 = arith.constant dense<0.000000e+00> : vector<128x128xf32>
    %8 = tpu.matmul %4, %7, %cst_3 {dimension_numbers = #tpu.dot_dimension_numbers<[1], [1], [0], [0], [0, 0, 1, 0], [], []>} : vector<128x128xf32>, vector<128x128xf32>, vector<128x128xf32> -> vector<128x128xf32>
    %c0_4 = arith.constant 0 : index
    %c0_5 = arith.constant 0 : index
    %9 = vector.load %arg5[%c0_4, %c0_5] : memref<128x128xf32, #tpu.memory_space<vmem>>, vector<128x128xf32>
    %c0_6 = arith.constant 0 : index
    %c0_7 = arith.constant 0 : index
    %10 = vector.load %arg6[%c0_6, %c0_7] : memref<128x128xf32, #tpu.memory_space<vmem>>, vector<128x128xf32>
    %cst_8 = arith.constant 2.000000e+00 : f32
    %11 = vector.broadcast %cst_8 : f32 to vector<128x128xf32>
    %12 = arith.mulf %10, %11 : vector<128x128xf32>
    %cst_9 = arith.constant dense<0.000000e+00> : vector<128x128xf32>
    %13 = tpu.matmul %9, %12, %cst_9 {dimension_numbers = #tpu.dot_dimension_numbers<[1], [1], [0], [0], [0, 0, 1, 0], [], []>} : vector<128x128xf32>, vector<128x128xf32>, vector<128x128xf32> -> vector<128x128xf32>
    %c0_10 = arith.constant 0 : index
    %c0_11 = arith.constant 0 : index
    %14 = vector.load %arg7[%c0_10, %c0_11] : memref<128x2xf32, #tpu.memory_space<vmem>>, vector<128x1xf32>
    %c0_12 = arith.constant 0 : index
    %c1 = arith.constant 1 : index
    %15 = vector.load %arg7[%c0_12, %c1] : memref<128x2xf32, #tpu.memory_space<vmem>>, vector<128x1xf32>
    %c0_13 = arith.constant 0 : index
    %c0_14 = arith.constant 0 : index
    %16 = vector.load %arg8[%c0_13, %c0_14] : memref<2x128xf32, #tpu.memory_space<vmem>>, vector<1x128xf32>
    %c1_15 = arith.constant 1 : index
    %c0_16 = arith.constant 0 : index
    %17 = vector.load %arg8[%c1_15, %c0_16] : memref<2x128xf32, #tpu.memory_space<vmem>>, vector<1x128xf32>
    %18 = vector.broadcast %14 : vector<128x1xf32> to vector<128x128xf32>
    %19 = vector.broadcast %16 : vector<1x128xf32> to vector<128x128xf32>
    %20 = arith.addf %18, %19 : vector<128x128xf32>
    %21 = arith.subf %20, %8 : vector<128x128xf32>
    %cst_17 = arith.constant 9.99999996E-13 : f32
    %22 = vector.broadcast %cst_17 : f32 to vector<128x128xf32>
    %23 = arith.maximumf %21, %22 : vector<128x128xf32>
    %24 = math.sqrt %23 : vector<128x128xf32>
    %25 = vector.broadcast %15 : vector<128x1xf32> to vector<128x128xf32>
    %26 = vector.broadcast %17 : vector<1x128xf32> to vector<128x128xf32>
    %27 = arith.addf %25, %26 : vector<128x128xf32>
    %28 = arith.subf %27, %13 : vector<128x128xf32>
    %cst_18 = arith.constant 9.99999996E-13 : f32
    %29 = vector.broadcast %cst_18 : f32 to vector<128x128xf32>
    %30 = arith.maximumf %28, %29 : vector<128x128xf32>
    %31 = math.sqrt %30 : vector<128x128xf32>
    %32 = arith.subf %24, %31 : vector<128x128xf32>
    %33 = math.absf %32 : vector<128x128xf32>
    %cst_19 = arith.constant 1.000000e+00 : f32
    %34 = vector.broadcast %cst_19 : f32 to vector<128x128xf32>
    %35 = arith.cmpf olt, %33, %34 : vector<128x128xf32>
    %cst_20 = arith.constant 5.000000e-01 : f32
    %36 = vector.broadcast %cst_20 : f32 to vector<128x128xf32>
    %37 = arith.mulf %36, %32 : vector<128x128xf32>
    %38 = arith.mulf %37, %32 : vector<128x128xf32>
    %cst_21 = arith.constant 5.000000e-01 : f32
    %39 = vector.broadcast %cst_21 : f32 to vector<128x128xf32>
    %40 = arith.subf %33, %39 : vector<128x128xf32>
    %41 = arith.select %35, %38, %40 : vector<128x128xi1>, vector<128x128xf32>
    %42 = arith.cmpi eq, %1, %3 : i32
    %cst_22 = arith.constant 1.000000e+00 : f32
    %cst_23 = arith.constant 2.000000e+00 : f32
    %43 = arith.select %42, %cst_22, %cst_23 : f32
    %44 = arith.cmpi eq, %1, %3 : i32
    %c0_i32 = arith.constant 0 : i32
    %45 = arith.cmpi eq, %1, %c0_i32 : i32
    %46 = arith.ori %44, %45 : i1
    %c0_i32_24 = arith.constant 0 : i32
    %47 = arith.cmpi eq, %3, %c0_i32_24 : i32
    %48 = arith.ori %46, %47 : i1
    %49 = arith.extui %48 : i1 to i32
    %c0_i32_25 = arith.constant 0 : i32
    %50 = arith.cmpi ne, %49, %c0_i32_25 : i32
    scf.if %50 {
      %c128_i32 = arith.constant 128 : i32
      %54 = arith.muli %1, %c128_i32 : i32
      %55 = tpu.iota {dimensions = array<i32: 0>} : vector<128x128xi32>
      %56 = vector.broadcast %54 : i32 to vector<128x128xi32>
      %57 = arith.addi %56, %55 : vector<128x128xi32>
      %c128_i32_27 = arith.constant 128 : i32
      %58 = arith.muli %3, %c128_i32_27 : i32
      %59 = tpu.iota {dimensions = array<i32: 1>} : vector<128x128xi32>
      %60 = vector.broadcast %58 : i32 to vector<128x128xi32>
      %61 = arith.addi %60, %59 : vector<128x128xi32>
      %62 = arith.cmpi ne, %57, %61 : vector<128x128xi32>
      %c8_i32 = arith.constant 8 : i32
      %63 = vector.broadcast %c8_i32 : i32 to vector<128x128xi32>
      %64 = arith.cmpi slt, %57, %63 : vector<128x128xi32>
      %65 = arith.andi %62, %64 : vector<128x128xi1>
      %c8_i32_28 = arith.constant 8 : i32
      %66 = vector.broadcast %c8_i32_28 : i32 to vector<128x128xi32>
      %67 = arith.cmpi slt, %61, %66 : vector<128x128xi32>
      %68 = arith.andi %65, %67 : vector<128x128xi1>
      %cst_29 = arith.constant 0.000000e+00 : f32
      %69 = vector.broadcast %cst_29 : f32 to vector<128x128xf32>
      %70 = arith.select %68, %41, %69 : vector<128x128xi1>, vector<128x128xf32>
      %71 = vector.shape_cast %70 : vector<128x128xf32> to vector<16x8x128xf32>
      %cst_30 = arith.constant dense<0.000000e+00> : vector<8x128xf32>
      %72 = vector.multi_reduction <add>, %71, %cst_30 [0] : vector<16x8x128xf32> to vector<8x128xf32>
      %73 = vector.broadcast %43 : f32 to vector<8x128xf32>
      %74 = arith.mulf %73, %72 : vector<8x128xf32>
      %c0_31 = arith.constant 0 : index
      %c0_32 = arith.constant 0 : index
      %c0_33 = arith.constant 0 : index
      %75 = vector.load %arg9[%c0_31, %c0_32, %c0_33] : memref<1x8x128xf32, #tpu.memory_space<vmem>>, vector<1x8x128xf32>
      %76 = vector.shape_cast %75 : vector<1x8x128xf32> to vector<8x128xf32>
      %77 = vector.shape_cast %74 : vector<8x128xf32> to vector<1x8x128xf32>
      tpu.vector_store %arg9[%c0_31, %c0_32, %c0_33], %77 {strides = array<i32>} : memref<1x8x128xf32, #tpu.memory_space<vmem>>, vector<1x8x128xf32>,
    } else {
    }
    %true = arith.constant true
    %51 = arith.xori %48, %true : i1
    %52 = arith.extui %51 : i1 to i32
    %c0_i32_26 = arith.constant 0 : i32
    %53 = arith.cmpi ne, %52, %c0_i32_26 : i32
    scf.if %53 {
      %54 = vector.shape_cast %41 : vector<128x128xf32> to vector<16x8x128xf32>
      %cst_27 = arith.constant dense<0.000000e+00> : vector<8x128xf32>
      %55 = vector.multi_reduction <add>, %54, %cst_27 [0] : vector<16x8x128xf32> to vector<8x128xf32>
      %56 = vector.broadcast %43 : f32 to vector<8x128xf32>
      %57 = arith.mulf %56, %55 : vector<8x128xf32>
      %c0_28 = arith.constant 0 : index
      %c0_29 = arith.constant 0 : index
      %c0_30 = arith.constant 0 : index
      %58 = vector.load %arg9[%c0_28, %c0_29, %c0_30] : memref<1x8x128xf32, #tpu.memory_space<vmem>>, vector<1x8x128xf32>
      %59 = vector.shape_cast %58 : vector<1x8x128xf32> to vector<8x128xf32>
      %60 = vector.shape_cast %57 : vector<8x128xf32> to vector<1x8x128xf32>
      tpu.vector_store %arg9[%c0_28, %c0_29, %c0_30], %60 {strides = array<i32>} : memref<1x8x128xf32, #tpu.memory_space<vmem>>, vector<1x8x128xf32>,
    } else {
    }
    return
  }
  func.func @transform_0(%arg0: i32, %arg1: memref<1xi32, #tpu.memory_space<smem>>, %arg2: memref<1xi32, #tpu.memory_space<smem>>) -> (i32, i32) {
    %0 = arith.index_cast %arg0 : i32 to index
    %1 = memref.load %arg1[%0] : memref<1xi32, #tpu.memory_space<smem>>
    %c0_i32 = arith.constant 0 : i32
    %c0_i32_0 = arith.constant 0 : i32
    return %1, %c0_i32 : i32, i32
  }
  func.func @transform_1(%arg0: i32, %arg1: memref<1xi32, #tpu.memory_space<smem>>, %arg2: memref<1xi32, #tpu.memory_space<smem>>) -> (i32, i32) {
    %0 = arith.index_cast %arg0 : i32 to index
    %1 = memref.load %arg2[%0] : memref<1xi32, #tpu.memory_space<smem>>
    %c0_i32 = arith.constant 0 : i32
    %c0_i32_0 = arith.constant 0 : i32
    return %1, %c0_i32 : i32, i32
  }
  func.func @transform_2(%arg0: i32, %arg1: memref<1xi32, #tpu.memory_space<smem>>, %arg2: memref<1xi32, #tpu.memory_space<smem>>) -> (i32, i32) {
    %0 = arith.index_cast %arg0 : i32 to index
    %1 = memref.load %arg1[%0] : memref<1xi32, #tpu.memory_space<smem>>
    %c0_i32 = arith.constant 0 : i32
    %c0_i32_0 = arith.constant 0 : i32
    return %1, %c0_i32 : i32, i32
  }
  func.func @transform_3(%arg0: i32, %arg1: memref<1xi32, #tpu.memory_space<smem>>, %arg2: memref<1xi32, #tpu.memory_space<smem>>) -> (i32, i32) {
    %0 = arith.index_cast %arg0 : i32 to index
    %1 = memref.load %arg2[%0] : memref<1xi32, #tpu.memory_space<smem>>
    %c0_i32 = arith.constant 0 : i32
    %c0_i32_0 = arith.constant 0 : i32
    return %1, %c0_i32 : i32, i32
  }
  func.func @transform_4(%arg0: i32, %arg1: memref<1xi32, #tpu.memory_space<smem>>, %arg2: memref<1xi32, #tpu.memory_space<smem>>) -> (i32, i32) {
    %0 = arith.index_cast %arg0 : i32 to index
    %1 = memref.load %arg1[%0] : memref<1xi32, #tpu.memory_space<smem>>
    %c0_i32 = arith.constant 0 : i32
    %c0_i32_0 = arith.constant 0 : i32
    return %1, %c0_i32 : i32, i32
  }
  func.func @transform_5(%arg0: i32, %arg1: memref<1xi32, #tpu.memory_space<smem>>, %arg2: memref<1xi32, #tpu.memory_space<smem>>) -> (i32, i32) {
    %0 = arith.index_cast %arg0 : i32 to index
    %1 = memref.load %arg2[%0] : memref<1xi32, #tpu.memory_space<smem>>
    %c0_i32 = arith.constant 0 : i32
    %c0_i32_0 = arith.constant 0 : i32
    return %c0_i32, %1 : i32, i32
  }
  func.func @transform_6(%arg0: i32, %arg1: memref<1xi32, #tpu.memory_space<smem>>, %arg2: memref<1xi32, #tpu.memory_space<smem>>) -> (i32, i32, i32) {
    %c0_i32 = arith.constant 0 : i32
    %c0_i32_0 = arith.constant 0 : i32
    %c0_i32_1 = arith.constant 0 : i32
    return %arg0, %c0_i32, %c0_i32_0 : i32, i32, i32
  }
}

</mosaic_0001>

<llo_original>
// kernel: tpu_custom_call.1
$region0: #{tpu_custom_call.1}
  #allocation0 [shape = 'u32[]', space=smem, size = 0x4, offset = 0x4, fixed_abs, tag = 'smem constant byte address 0x4 - core index']
  #allocation1 [shape = 'u32[144,128]{1,0:T(1,128)}', space=vmem, size = 0x12000, scoped, tag = 'internal scratch']
  #allocation2 [shape = 's32[1]{0}', space=sflag, size = 0x4, scoped, tag = 'scoped memory for tpu_custom_call.1']
  #allocation3 [shape = 's32[1]{0:T(128)S(6)}', space=smem, size = 0x200, scoped, tag = 'prefetched SMEM operand 0']
  #allocation4 [shape = 's32[1]{0:T(128)S(6)}', space=smem, size = 0x200, scoped, tag = 'prefetched SMEM operand 1']
  %s0 = inlined_call_operand.<no memory space> [shape: s32[1], index: 0, kind: input, shape index: {}]
  %s1 = inlined_call_operand.<no memory space> [shape: s32[1], index: 1, kind: input, shape index: {}]
  %s2 = inlined_call_operand.vmem [shape: f32[128,128], index: 2, kind: input, shape index: {}]
  %s3 = inlined_call_operand.hbm [shape: f32[128,128], index: 3, kind: input, shape index: {}]
  %s4 = inlined_call_operand.hbm [shape: f32[128,128], index: 4, kind: input, shape index: {}]
  %s5 = inlined_call_operand.hbm [shape: f32[128,128], index: 5, kind: input, shape index: {}]
  %s6 = inlined_call_operand.vmem [shape: f32[128,2], index: 6, kind: input, shape index: {}]
  %s7 = inlined_call_operand.vmem [shape: f32[2,128], index: 7, kind: input, shape index: {}]
  %s8 = inlined_call_operand.hbm [shape: f32[1,8,128], index: 8, kind: output, shape index: {}]
  %s9 = sld [smem:[#allocation0]]
  $region54: #{tpu_custom_call.1} parent=0
    _
  %s11 = ssub.s32 1, %s9
  %s12 = scalar_select 0, %s11, %s9
  %13 = sst [smem:[#allocation3]] %s0
  %14 = sst [smem:[#allocation4]] %s1
  $region1: #{tpu_custom_call.1} parent=0
    #allocation5 [shape = 'u8[65536]{0}', space=vmem, size = 0x10000, scoped, tag = 'input window, operand 3, single buffered']
    #allocation6 [shape = 's32[1]{0}', space=sflag, size = 0x4, scoped, tag = 'scoped memory for tpu_custom_call.1']
    #allocation7 [shape = 's32[1]{0}', space=sflag, size = 0x4, scoped, tag = 'scoped memory for tpu_custom_call.1']
    #allocation8 [shape = 'u8[65536]{0}', space=vmem, size = 0x10000, scoped, tag = 'input window, operand 4, single buffered']
    #allocation9 [shape = 's32[1]{0}', space=sflag, size = 0x4, scoped, tag = 'scoped memory for tpu_custom_call.1']
    #allocation10 [shape = 'u8[65536]{0}', space=vmem, size = 0x10000, scoped, tag = 'input window, operand 5, single buffered']
    #allocation11 [shape = 'u8[4096]{0}', space=vmem, size = 0x1000, scoped, tag = 'output window, operand 0, single buffered']
    %15 = vsyncpa [#allocation6], 0
    %16 = vsyncpa [#allocation9], 0
    %17 = vsyncpa [#allocation7], 0
    // Predicated region
    $region2: #{tpu_custom_call.1} parent=1 // pred_check
      _
    $region3: #{tpu_custom_call.1} parent=1 // pred_check_branch
      %19 = sbr.rel (0) target = $region5
    $region4: #{tpu_custom_call.1} parent=1 // pred_region
      %s20 = sld [smem:[#allocation3]]
      %s21 = smul.u32 16, %s20
      %p22 = scmp.lt.s32.totalorder %s21, 15
      %s23 = scalar_select %p22, %s21, 15
      %s24 = smul.addr %s23, 8
      %s25 = scalar_lea.vmem %s2, %s24
      %s26 = sld [smem:[#allocation3]]
      %s27 = smul.u32 16, %s26
    $region5: #{tpu_custom_call.1} parent=1 // pred_fallthru
      _
    // Predicated region
    $region6: #{tpu_custom_call.1} parent=1 // pred_check
      _
    $region7: #{tpu_custom_call.1} parent=1 // pred_check_branch
      %29 = sbr.rel (0) target = $region9
    $region8: #{tpu_custom_call.1} parent=1 // pred_region
      %s30 = sld [smem:[#allocation4]]
      %s31 = smul.u32 16, %s30
      %s33 = ssub.s32 2048, 2048
      %34 = vsyncadd [#allocation6], %s33
      %s35 = smul.addr %s31, 128
      %s36 = scalar_lea.hbm %s3, %s35
      %s37 = sshll.u32 [#allocation5], 4
      %s38 = int_to_ptr.vmem [resolvable:$true] %s37
      %43 = dma.hbm_to_vmem [thread:$0]  %s36, 2048, %s38, [#allocation6], 128, 128, 8
    $region9: #{tpu_custom_call.1} parent=1 // pred_fallthru
      _
    // Predicated region
    $region10: #{tpu_custom_call.1} parent=1 // pred_check
      _
    $region11: #{tpu_custom_call.1} parent=1 // pred_check_branch
      %45 = sbr.rel (0) target = $region13
    $region12: #{tpu_custom_call.1} parent=1 // pred_region
      %s46 = sld [smem:[#allocation3]]
      %s47 = smul.u32 16, %s46
      %s49 = ssub.s32 2048, 2048
      %50 = vsyncadd [#allocation9], %s49
      %s51 = smul.addr %s47, 128
      %s52 = scalar_lea.hbm %s4, %s51
      %s53 = sshll.u32 [#allocation8], 4
      %s54 = int_to_ptr.vmem [resolvable:$true] %s53
      %59 = dma.hbm_to_vmem [thread:$0]  %s52, 2048, %s54, [#allocation9], 128, 128, 8
    $region13: #{tpu_custom_call.1} parent=1 // pred_fallthru
      _
    // Predicated region
    $region14: #{tpu_custom_call.1} parent=1 // pred_check
      _
    $region15: #{tpu_custom_call.1} parent=1 // pred_check_branch
      %61 = sbr.rel (0) target = $region17
    $region16: #{tpu_custom_call.1} parent=1 // pred_region
      %s62 = sld [smem:[#allocation4]]
      %s63 = smul.u32 16, %s62
      %s65 = ssub.s32 2048, 2048
      %66 = vsyncadd [#allocation9], %s65
      %s67 = smul.addr %s63, 128
      %s68 = scalar_lea.hbm %s5, %s67
      %s69 = sshll.u32 [#allocation10], 4
      %s70 = int_to_ptr.vmem [resolvable:$true] %s69
      %75 = dma.hbm_to_vmem [thread:$0]  %s68, 2048, %s70, [#allocation9], 128, 128, 8
    $region17: #{tpu_custom_call.1} parent=1 // pred_fallthru
      _
    // Predicated region
    $region18: #{tpu_custom_call.1} parent=1 // pred_check
      _
    $region19: #{tpu_custom_call.1} parent=1 // pred_check_branch
      %77 = sbr.rel (0) target = $region21
    $region20: #{tpu_custom_call.1} parent=1 // pred_region
      %s78 = sld [smem:[#allocation3]]
      %s79 = smul.u32 16, %s78
      %p80 = scmp.lt.s32.totalorder %s79, 15
      %s81 = scalar_select %p80, %s79, 15
      %s82 = smul.addr %s81, 8
      %s83 = scalar_lea.vmem %s6, %s82
      %s84 = sld [smem:[#allocation3]]
      %s85 = smul.u32 16, %s84
    $region21: #{tpu_custom_call.1} parent=1 // pred_fallthru
      _
    // Predicated region
    $region22: #{tpu_custom_call.1} parent=1 // pred_check
      _
    $region23: #{tpu_custom_call.1} parent=1 // pred_check_branch
      %87 = sbr.rel (0) target = $region25
    $region24: #{tpu_custom_call.1} parent=1 // pred_region
      %s88 = sld [smem:[#allocation4]]
      %p89 = scmp.lt.s32.totalorder %s88, 0
      %s90 = scalar_select %p89, %s88, 0
      %s91 = smul.addr %s90, 2
      %s92 = scalar_lea.vmem %s7, %s91
      %s93 = sld [smem:[#allocation4]]
    $region25: #{tpu_custom_call.1} parent=1 // pred_fallthru
      _
    // Predicated region
    $region26: #{tpu_custom_call.1} parent=1 // pred_check
      _
    $region27: #{tpu_custom_call.1} parent=1 // pred_check_branch
      %95 = sbr.rel (0) target = $region29
    $region28: #{tpu_custom_call.1} parent=1 // pred_region
      %96 = dma.done [#allocation6], 2048
    $region29: #{tpu_custom_call.1} parent=1 // pred_fallthru
      _
    // Predicated region
    $region30: #{tpu_custom_call.1} parent=1 // pred_check
      _
    $region31: #{tpu_custom_call.1} parent=1 // pred_check_branch
      %98 = sbr.rel (0) target = $region33
    $region32: #{tpu_custom_call.1} parent=1 // pred_region
      %99 = dma.done [#allocation9], 2048
    $region33: #{tpu_custom_call.1} parent=1 // pred_fallthru
      _
    // Predicated region
    $region34: #{tpu_custom_call.1} parent=1 // pred_check
      _
    $region35: #{tpu_custom_call.1} parent=1 // pred_check_branch
      %101 = sbr.rel (0) target = $region37
    $region36: #{tpu_custom_call.1} parent=1 // pred_region
      %102 = dma.done [#allocation9], 2048
    $region37: #{tpu_custom_call.1} parent=1 // pred_fallthru
      _
    %s103 = sld [smem:[#allocation3]]
    %s104 = smul.u32 16, %s103
    %p105 = scmp.lt.s32.totalorder %s104, 15
    %s106 = scalar_select %p105, %s104, 15
    %s107 = smul.addr %s106, 8
    %s108 = scalar_lea.vmem %s2, %s107
    %s109 = sld [smem:[#allocation3]]
    %s110 = smul.u32 16, %s109
    %p111 = scmp.lt.s32.totalorder %s110, 15
    %s112 = scalar_select %p111, %s110, 15
    %s113 = smul.addr %s112, 8
    %s114 = scalar_lea.vmem %s6, %s113
    %s115 = sld [smem:[#allocation4]]
    %p116 = scmp.lt.s32.totalorder %s115, 0
    %s117 = scalar_select %p116, %s115, 0
    %s118 = smul.addr %s117, 2
    %s119 = scalar_lea.vmem %s7, %s118
    %s120 = sld [smem:[#allocation3]]
    %s121 = smul.u32 16, %s120
    %p122 = scmp.lt.s32.totalorder %s121, 15
    %s123 = scalar_select %p122, %s121, 15
    %s124 = smul.addr %s123, 8
    %s125 = scalar_lea.vmem %s2, %s124
    %s126 = sld [smem:[#allocation3]]
    %s127 = smul.u32 16, %s126
    %s128 = sld [smem:[#allocation4]]
    %s129 = smul.u32 16, %s128
    %s130 = sld [smem:[#allocation3]]
    %s131 = smul.u32 16, %s130
    %s132 = sld [smem:[#allocation4]]
    %s133 = smul.u32 16, %s132
    %s134 = sld [smem:[#allocation3]]
    %s135 = smul.u32 16, %s134
    %p136 = scmp.lt.s32.totalorder %s135, 15
    %s137 = scalar_select %p136, %s135, 15
    %s138 = smul.addr %s137, 8
    %s139 = scalar_lea.vmem %s6, %s138
    %s140 = sld [smem:[#allocation3]]
    %s141 = smul.u32 16, %s140
    %s142 = sld [smem:[#allocation4]]
    %p143 = scmp.lt.s32.totalorder %s142, 0
    %s144 = scalar_select %p143, %s142, 0
    %s145 = smul.addr %s144, 2
    %s146 = scalar_lea.vmem %s7, %s145
    %s147 = sld [smem:[#allocation4]]
    %s148 = sld [smem:[#allocation3]]
    %s149 = sld [smem:[#allocation4]]
    %v150 = vld [vmem:[%s125] sm:$0xff]
    %v151 = vld [vmem:[%s125 + $0x8] sm:$0xff]
    %v152 = vld [vmem:[%s125 + $0x10] sm:$0xff]
    %v153 = vld [vmem:[%s125 + $0x18] sm:$0xff]
    %v154 = vld [vmem:[%s125 + $0x20] sm:$0xff]
    %v155 = vld [vmem:[%s125 + $0x28] sm:$0xff]
    %v156 = vld [vmem:[%s125 + $0x30] sm:$0xff]
    %v157 = vld [vmem:[%s125 + $0x38] sm:$0xff]
    %v158 = vld [vmem:[%s125 + $0x40] sm:$0xff]
    %v159 = vld [vmem:[%s125 + $0x48] sm:$0xff]
    %v160 = vld [vmem:[%s125 + $0x50] sm:$0xff]
    %v161 = vld [vmem:[%s125 + $0x58] sm:$0xff]
    %v162 = vld [vmem:[%s125 + $0x60] sm:$0xff]
    %v163 = vld [vmem:[%s125 + $0x68] sm:$0xff]
    %v164 = vld [vmem:[%s125 + $0x70] sm:$0xff]
    %v165 = vld [vmem:[%s125 + $0x78] sm:$0xff]
    %v166 = vld [vmem:[#allocation5] sm:$0xff]
    %v167 = vld [vmem:[#allocation5 + $0x8] sm:$0xff]
    %v168 = vld [vmem:[#allocation5 + $0x10] sm:$0xff]
    %v169 = vld [vmem:[#allocation5 + $0x18] sm:$0xff]
    %v170 = vld [vmem:[#allocation5 + $0x20] sm:$0xff]
    %v171 = vld [vmem:[#allocation5 + $0x28] sm:$0xff]
    %v172 = vld [vmem:[#allocation5 + $0x30] sm:$0xff]
    %v173 = vld [vmem:[#allocation5 + $0x38] sm:$0xff]
    %v174 = vld [vmem:[#allocation5 + $0x40] sm:$0xff]
    %v175 = vld [vmem:[#allocation5 + $0x48] sm:$0xff]
    %v176 = vld [vmem:[#allocation5 + $0x50] sm:$0xff]
    %v177 = vld [vmem:[#allocation5 + $0x58] sm:$0xff]
    %v178 = vld [vmem:[#allocation5 + $0x60] sm:$0xff]
    %v179 = vld [vmem:[#allocation5 + $0x68] sm:$0xff]
    %v180 = vld [vmem:[#allocation5 + $0x70] sm:$0xff]
    %v181 = vld [vmem:[#allocation5 + $0x78] sm:$0xff]
    %v182 = vmul.f32 %v166, 2.0
    %v183 = vmul.f32 %v167, 2.0
    %v184 = vmul.f32 %v168, 2.0
    %v185 = vmul.f32 %v169, 2.0
    %v186 = vmul.f32 %v170, 2.0
    %v187 = vmul.f32 %v171, 2.0
    %v188 = vmul.f32 %v172, 2.0
    %v189 = vmul.f32 %v173, 2.0
    %v190 = vmul.f32 %v174, 2.0
    %v191 = vmul.f32 %v175, 2.0
    %v192 = vmul.f32 %v176, 2.0
    %v193 = vmul.f32 %v177, 2.0
    %v194 = vmul.f32 %v178, 2.0
    %v195 = vmul.f32 %v179, 2.0
    %v196 = vmul.f32 %v180, 2.0
    %v197 = vmul.f32 %v181, 2.0
    %198 = vmatprep.subr.mxu0 0.0
    %199 = vmatpush1.xpose.msra.mxu0 %v182
    %200 = vmatprep.subr.mxu0 0.0
    %201 = vmatpush1.xpose.msra.mxu0 %v183
    %202 = vmatprep.subr.mxu0 0.0
    %203 = vmatpush1.xpose.msra.mxu0 %v184
    %204 = vmatprep.subr.mxu0 0.0
    %205 = vmatpush1.xpose.msra.mxu0 %v185
    %206 = vmatprep.subr.mxu0 0.0
    %207 = vmatpush1.xpose.msra.mxu0 %v186
    %208 = vmatprep.subr.mxu0 0.0
    %209 = vmatpush1.xpose.msra.mxu0 %v187
    %210 = vmatprep.subr.mxu0 0.0
    %211 = vmatpush1.xpose.msra.mxu0 %v188
    %212 = vmatprep.subr.mxu0 0.0
    %213 = vmatpush1.xpose.msra.mxu0 %v189
    %214 = vmatprep.subr.mxu0 0.0
    %215 = vmatpush1.xpose.msra.mxu0 %v190
    %216 = vmatprep.subr.mxu0 0.0
    %217 = vmatpush1.xpose.msra.mxu0 %v191
    %218 = vmatprep.subr.mxu0 0.0
    %219 = vmatpush1.xpose.msra.mxu0 %v192
    %220 = vmatprep.subr.mxu0 0.0
    %221 = vmatpush1.xpose.msra.mxu0 %v193
    %222 = vmatprep.subr.mxu0 0.0
    %223 = vmatpush1.xpose.msra.mxu0 %v194
    %224 = vmatprep.subr.mxu0 0.0
    %225 = vmatpush1.xpose.msra.mxu0 %v195
    %226 = vmatprep.subr.mxu0 0.0
    %227 = vmatpush1.xpose.msra.mxu0 %v196
    %228 = vmatprep.subr.mxu0 0.0
    %229 = vmatpush1.xpose.msra.mxu0 %v197
    %230 = vmatprep.subr.mxu0 0.0
    %231 = vmatpush1.xpose.msra.mxu0 0.0
    %232 = vmatprep.subr.mxu0 0.0
    %233 = vmatpush1.xpose.msra.mxu0 0.0
    %234 = vmatprep.subr.mxu0 0.0
    %235 = vmatpush1.xpose.msra.mxu0 0.0
    %236 = vmatprep.subr.mxu0 0.0
    %237 = vmatpush1.xpose.msra.mxu0 0.0
    %238 = vmatprep.subr.mxu0 0.0
    %239 = vmatpush1.xpose.msra.mxu0 0.0
    %240 = vmatprep.subr.mxu0 0.0
    %241 = vmatpush1.xpose.msra.mxu0 0.0
    %242 = vmatprep.subr.mxu0 0.0
    %243 = vmatpush1.xpose.msra.mxu0 0.0
    %244 = vmatprep.subr.mxu0 0.0
    %245 = vmatpush1.xpose.msra.mxu0 0.0
    %246 = vmatprep.subr.mxu0 0.0
    %247 = vmatpush1.xpose.msra.mxu0 0.0
    %248 = vmatprep.subr.mxu0 0.0
    %249 = vmatpush1.xpose.msra.mxu0 0.0
    %250 = vmatprep.subr.mxu0 0.0
    %251 = vmatpush1.xpose.msra.mxu0 0.0
    %252 = vmatprep.subr.mxu0 0.0
    %253 = vmatpush1.xpose.msra.mxu0 0.0
    %254 = vmatprep.subr.mxu0 0.0
    %255 = vmatpush1.xpose.msra.mxu0 0.0
    %256 = vmatprep.subr.mxu0 0.0
    %257 = vmatpush1.xpose.msra.mxu0 0.0
    %258 = vmatprep.subr.mxu0 0.0
    %259 = vmatpush1.xpose.msra.mxu0 0.0
    %260 = vmatprep.subr.mxu0 0.0
    %261 = vmatpush1.xpose.msra.mxu0 0.0
    %262 = vmatprep.mubr.f32.mxu0 0.0
    %263 = vmatmul.mubr.f32.gmra.mrb[0].mxu0 %v150
    %v264 = vpop.f32.mrb[0].mxu0
    %v265 = vadd.f32 0.0, %v264
    %v266 = vpop.f32.mrb[0].mxu0
    %267 = vmatprep.mubr.f32.mxu0 0.0
    %268 = vmatmul.mubr.f32.gmra.mrb[0].mxu0 %v151
    %v269 = vpop.f32.mrb[0].mxu0
    %v270 = vadd.f32 0.0, %v269
    %v271 = vpop.f32.mrb[0].mxu0
    %272 = vmatprep.mubr.f32.mxu0 0.0
    %273 = vmatmul.mubr.f32.gmra.mrb[0].mxu0 %v152
    %v274 = vpop.f32.mrb[0].mxu0
    %v275 = vadd.f32 0.0, %v274
    %v276 = vpop.f32.mrb[0].mxu0
    %277 = vmatprep.mubr.f32.mxu0 0.0
    %278 = vmatmul.mubr.f32.gmra.mrb[0].mxu0 %v153
    %v279 = vpop.f32.mrb[0].mxu0
    %v280 = vadd.f32 0.0, %v279
    %v281 = vpop.f32.mrb[0].mxu0
    %282 = vmatprep.mubr.f32.mxu0 0.0
    %283 = vmatmul.mubr.f32.gmra.mrb[0].mxu0 %v154
    %v284 = vpop.f32.mrb[0].mxu0
    %v285 = vadd.f32 0.0, %v284
    %v286 = vpop.f32.mrb[0].mxu0
    %287 = vmatprep.mubr.f32.mxu0 0.0
    %288 = vmatmul.mubr.f32.gmra.mrb[0].mxu0 %v155
    %v289 = vpop.f32.mrb[0].mxu0
    %v290 = vadd.f32 0.0, %v289
    %v291 = vpop.f32.mrb[0].mxu0
    %292 = vmatprep.mubr.f32.mxu0 0.0
    %293 = vmatmul.mubr.f32.gmra.mrb[0].mxu0 %v156
    %v294 = vpop.f32.mrb[0].mxu0
    %v295 = vadd.f32 0.0, %v294
    %v296 = vpop.f32.mrb[0].mxu0
    %297 = vmatprep.mubr.f32.mxu0 0.0
    %298 = vmatmul.mubr.f32.gmra.mrb[0].mxu0 %v157
    %v299 = vpop.f32.mrb[0].mxu0
    %v300 = vadd.f32 0.0, %v299
    %v301 = vpop.f32.mrb[0].mxu0
    %302 = vmatprep.mubr.f32.mxu0 0.0
    %303 = vmatmul.mubr.f32.gmra.mrb[0].mxu0 %v158
    %v304 = vpop.f32.mrb[0].mxu0
    %v305 = vadd.f32 0.0, %v304
    %v306 = vpop.f32.mrb[0].mxu0
    %307 = vmatprep.mubr.f32.mxu0 0.0
    %308 = vmatmul.mubr.f32.gmra.mrb[0].mxu0 %v159
    %v309 = vpop.f32.mrb[0].mxu0
    %v310 = vadd.f32 0.0, %v309
    %v311 = vpop.f32.mrb[0].mxu0
    %312 = vmatprep.mubr.f32.mxu0 0.0
    %313 = vmatmul.mubr.f32.gmra.mrb[0].mxu0 %v160
    %v314 = vpop.f32.mrb[0].mxu0
    %v315 = vadd.f32 0.0, %v314
    %v316 = vpop.f32.mrb[0].mxu0
    %317 = vmatprep.mubr.f32.mxu0 0.0
    %318 = vmatmul.mubr.f32.gmra.mrb[0].mxu0 %v161
    %v319 = vpop.f32.mrb[0].mxu0
    %v320 = vadd.f32 0.0, %v319
    %v321 = vpop.f32.mrb[0].mxu0
    %322 = vmatprep.mubr.f32.mxu0 0.0
    %323 = vmatmul.mubr.f32.gmra.mrb[0].mxu0 %v162
    %v324 = vpop.f32.mrb[0].mxu0
    %v325 = vadd.f32 0.0, %v324
    %v326 = vpop.f32.mrb[0].mxu0
    %327 = vmatprep.mubr.f32.mxu0 0.0
    %328 = vmatmul.mubr.f32.gmra.mrb[0].mxu0 %v163
    %v329 = vpop.f32.mrb[0].mxu0
    %v330 = vadd.f32 0.0, %v329
    %v331 = vpop.f32.mrb[0].mxu0
    %332 = vmatprep.mubr.f32.mxu0 0.0
    %333 = vmatmul.mubr.f32.gmra.mrb[0].mxu0 %v164
    %v334 = vpop.f32.mrb[0].mxu0
    %v335 = vadd.f32 0.0, %v334
    %v336 = vpop.f32.mrb[0].mxu0
    %337 = vmatprep.mubr.f32.mxu0 0.0
    %338 = vmatmul.mubr.f32.gmra.mrb[0].mxu0 %v165
    %v339 = vpop.f32.mrb[0].mxu0
    %v340 = vadd.f32 0.0, %v339
    %v341 = vpop.f32.mrb[0].mxu0
    %342 = vdwg.mxu0
    %v343 = vld [vmem:[#allocation8] sm:$0xff]
    %v344 = vld [vmem:[#allocation8 + $0x8] sm:$0xff]
    %v345 = vld [vmem:[#allocation8 + $0x10] sm:$0xff]
    %v346 = vld [vmem:[#allocation8 + $0x18] sm:$0xff]
    %v347 = vld [vmem:[#allocation8 + $0x20] sm:$0xff]
    %v348 = vld [vmem:[#allocation8 + $0x28] sm:$0xff]
    %v349 = vld [vmem:[#allocation8 + $0x30] sm:$0xff]
    %v350 = vld [vmem:[#allocation8 + $0x38] sm:$0xff]
    %v351 = vld [vmem:[#allocation8 + $0x40] sm:$0xff]
    %v352 = vld [vmem:[#allocation8 + $0x48] sm:$0xff]
    %v353 = vld [vmem:[#allocation8 + $0x50] sm:$0xff]
    %v354 = vld [vmem:[#allocation8 + $0x58] sm:$0xff]
    %v355 = vld [vmem:[#allocation8 + $0x60] sm:$0xff]
    %v356 = vld [vmem:[#allocation8 + $0x68] sm:$0xff]
    %v357 = vld [vmem:[#allocation8 + $0x70] sm:$0xff]
    %v358 = vld [vmem:[#allocation8 + $0x78] sm:$0xff]
    %v359 = vld [vmem:[#allocation10] sm:$0xff]
    %v360 = vld [vmem:[#allocation10 + $0x8] sm:$0xff]
    %v361 = vld [vmem:[#allocation10 + $0x10] sm:$0xff]
    %v362 = vld [vmem:[#allocation10 + $0x18] sm:$0xff]
    %v363 = vld [vmem:[#allocation10 + $0x20] sm:$0xff]
    %v364 = vld [vmem:[#allocation10 + $0x28] sm:$0xff]
    %v365 = vld [vmem:[#allocation10 + $0x30] sm:$0xff]
    %v366 = vld [vmem:[#allocation10 + $0x38] sm:$0xff]
    %v367 = vld [vmem:[#allocation10 + $0x40] sm:$0xff]
    %v368 = vld [vmem:[#allocation10 + $0x48] sm:$0xff]
    %v369 = vld [vmem:[#allocation10 + $0x50] sm:$0xff]
    %v370 = vld [vmem:[#allocation10 + $0x58] sm:$0xff]
    %v371 = vld [vmem:[#allocation10 + $0x60] sm:$0xff]
    %v372 = vld [vmem:[#allocation10 + $0x68] sm:$0xff]
    %v373 = vld [vmem:[#allocation10 + $0x70] sm:$0xff]
    %v374 = vld [vmem:[#allocation10 + $0x78] sm:$0xff]
    %v375 = vmul.f32 %v359, 2.0
    %v376 = vmul.f32 %v360, 2.0
    %v377 = vmul.f32 %v361, 2.0
    %v378 = vmul.f32 %v362, 2.0
    %v379 = vmul.f32 %v363, 2.0
    %v380 = vmul.f32 %v364, 2.0
    %v381 = vmul.f32 %v365, 2.0
    %v382 = vmul.f32 %v366, 2.0
    %v383 = vmul.f32 %v367, 2.0
    %v384 = vmul.f32 %v368, 2.0
    %v385 = vmul.f32 %v369, 2.0
    %v386 = vmul.f32 %v370, 2.0
    %v387 = vmul.f32 %v371, 2.0
    %v388 = vmul.f32 %v372, 2.0
    %v389 = vmul.f32 %v373, 2.0
    %v390 = vmul.f32 %v374, 2.0
    %391 = vmatprep.subr.mxu0 0.0
    %392 = vmatpush1.xpose.msra.mxu0 %v375
    %393 = vmatprep.subr.mxu0 0.0
    %394 = vmatpush1.xpose.msra.mxu0 %v376
    %395 = vmatprep.subr.mxu0 0.0
    %396 = vmatpush1.xpose.msra.mxu0 %v377
    %397 = vmatprep.subr.mxu0 0.0
    %398 = vmatpush1.xpose.msra.mxu0 %v378
    %399 = vmatprep.subr.mxu0 0.0
    %400 = vmatpush1.xpose.msra.mxu0 %v379
    %401 = vmatprep.subr.mxu0 0.0
    %402 = vmatpush1.xpose.msra.mxu0 %v380
    %403 = vmatprep.subr.mxu0 0.0
    %404 = vmatpush1.xpose.msra.mxu0 %v381
    %405 = vmatprep.subr.mxu0 0.0
    %406 = vmatpush1.xpose.msra.mxu0 %v382
    %407 = vmatprep.subr.mxu0 0.0
    %408 = vmatpush1.xpose.msra.mxu0 %v383
    %409 = vmatprep.subr.mxu0 0.0
    %410 = vmatpush1.xpose.msra.mxu0 %v384
    %411 = vmatprep.subr.mxu0 0.0
    %412 = vmatpush1.xpose.msra.mxu0 %v385
    %413 = vmatprep.subr.mxu0 0.0
    %414 = vmatpush1.xpose.msra.mxu0 %v386
    %415 = vmatprep.subr.mxu0 0.0
    %416 = vmatpush1.xpose.msra.mxu0 %v387
    %417 = vmatprep.subr.mxu0 0.0
    %418 = vmatpush1.xpose.msra.mxu0 %v388
    %419 = vmatprep.subr.mxu0 0.0
    %420 = vmatpush1.xpose.msra.mxu0 %v389
    %421 = vmatprep.subr.mxu0 0.0
    %422 = vmatpush1.xpose.msra.mxu0 %v390
    %423 = vmatprep.subr.mxu0 0.0
    %424 = vmatpush1.xpose.msra.mxu0 0.0
    %425 = vmatprep.subr.mxu0 0.0
    %426 = vmatpush1.xpose.msra.mxu0 0.0
    %427 = vmatprep.subr.mxu0 0.0
    %428 = vmatpush1.xpose.msra.mxu0 0.0
    %429 = vmatprep.subr.mxu0 0.0
    %430 = vmatpush1.xpose.msra.mxu0 0.0
    %431 = vmatprep.subr.mxu0 0.0
    %432 = vmatpush1.xpose.msra.mxu0 0.0
    %433 = vmatprep.subr.mxu0 0.0
    %434 = vmatpush1.xpose.msra.mxu0 0.0
    %435 = vmatprep.subr.mxu0 0.0
    %436 = vmatpush1.xpose.msra.mxu0 0.0
    %437 = vmatprep.subr.mxu0 0.0
    %438 = vmatpush1.xpose.msra.mxu0 0.0
    %439 = vmatprep.subr.mxu0 0.0
    %440 = vmatpush1.xpose.msra.mxu0 0.0
    %441 = vmatprep.subr.mxu0 0.0
    %442 = vmatpush1.xpose.msra.mxu0 0.0
    %443 = vmatprep.subr.mxu0 0.0
    %444 = vmatpush1.xpose.msra.mxu0 0.0
    %445 = vmatprep.subr.mxu0 0.0
    %446 = vmatpush1.xpose.msra.mxu0 0.0
    %447 = vmatprep.subr.mxu0 0.0
    %448 = vmatpush1.xpose.msra.mxu0 0.0
    %449 = vmatprep.subr.mxu0 0.0
    %450 = vmatpush1.xpose.msra.mxu0 0.0
    %451 = vmatprep.subr.mxu0 0.0
    %452 = vmatpush1.xpose.msra.mxu0 0.0
    %453 = vmatprep.subr.mxu0 0.0
    %454 = vmatpush1.xpose.msra.mxu0 0.0
    %455 = vmatprep.mubr.f32.mxu0 0.0
    %456 = vmatmul.mubr.f32.gmra.mrb[0].mxu0 %v343
    %v457 = vpop.f32.mrb[0].mxu0
    %v458 = vadd.f32 0.0, %v457
    %v459 = vpop.f32.mrb[0].mxu0
    %460 = vmatprep.mubr.f32.mxu0 0.0
    %461 = vmatmul.mubr.f32.gmra.mrb[0].mxu0 %v344
    %v462 = vpop.f32.mrb[0].mxu0
    %v463 = vadd.f32 0.0, %v462
    %v464 = vpop.f32.mrb[0].mxu0
    %465 = vmatprep.mubr.f32.mxu0 0.0
    %466 = vmatmul.mubr.f32.gmra.mrb[0].mxu0 %v345
    %v467 = vpop.f32.mrb[0].mxu0
    %v468 = vadd.f32 0.0, %v467
    %v469 = vpop.f32.mrb[0].mxu0
    %470 = vmatprep.mubr.f32.mxu0 0.0
    %471 = vmatmul.mubr.f32.gmra.mrb[0].mxu0 %v346
    %v472 = vpop.f32.mrb[0].mxu0
    %v473 = vadd.f32 0.0, %v472
    %v474 = vpop.f32.mrb[0].mxu0
    %475 = vmatprep.mubr.f32.mxu0 0.0
    %476 = vmatmul.mubr.f32.gmra.mrb[0].mxu0 %v347
    %v477 = vpop.f32.mrb[0].mxu0
    %v478 = vadd.f32 0.0, %v477
    %v479 = vpop.f32.mrb[0].mxu0
    %480 = vmatprep.mubr.f32.mxu0 0.0
    %481 = vmatmul.mubr.f32.gmra.mrb[0].mxu0 %v348
    %v482 = vpop.f32.mrb[0].mxu0
    %v483 = vadd.f32 0.0, %v482
    %v484 = vpop.f32.mrb[0].mxu0
    %485 = vmatprep.mubr.f32.mxu0 0.0
    %486 = vmatmul.mubr.f32.gmra.mrb[0].mxu0 %v349
    %v487 = vpop.f32.mrb[0].mxu0
    %v488 = vadd.f32 0.0, %v487
    %v489 = vpop.f32.mrb[0].mxu0
    %490 = vmatprep.mubr.f32.mxu0 0.0
    %491 = vmatmul.mubr.f32.gmra.mrb[0].mxu0 %v350
    %v492 = vpop.f32.mrb[0].mxu0
    %v493 = vadd.f32 0.0, %v492
    %v494 = vpop.f32.mrb[0].mxu0
    %495 = vmatprep.mubr.f32.mxu0 0.0
    %496 = vmatmul.mubr.f32.gmra.mrb[0].mxu0 %v351
    %v497 = vpop.f32.mrb[0].mxu0
    %v498 = vadd.f32 0.0, %v497
    %v499 = vpop.f32.mrb[0].mxu0
    %500 = vmatprep.mubr.f32.mxu0 0.0
    %501 = vmatmul.mubr.f32.gmra.mrb[0].mxu0 %v352
    %v502 = vpop.f32.mrb[0].mxu0
    %v503 = vadd.f32 0.0, %v502
    %v504 = vpop.f32.mrb[0].mxu0
    %505 = vmatprep.mubr.f32.mxu0 0.0
    %506 = vmatmul.mubr.f32.gmra.mrb[0].mxu0 %v353
    %v507 = vpop.f32.mrb[0].mxu0
    %v508 = vadd.f32 0.0, %v507
    %v509 = vpop.f32.mrb[0].mxu0
    %510 = vmatprep.mubr.f32.mxu0 0.0
    %511 = vmatmul.mubr.f32.gmra.mrb[0].mxu0 %v354
    %v512 = vpop.f32.mrb[0].mxu0
    %v513 = vadd.f32 0.0, %v512
    %v514 = vpop.f32.mrb[0].mxu0
    %515 = vmatprep.mubr.f32.mxu0 0.0
    %516 = vmatmul.mubr.f32.gmra.mrb[0].mxu0 %v355
    %v517 = vpop.f32.mrb[0].mxu0
    %v518 = vadd.f32 0.0, %v517
    %v519 = vpop.f32.mrb[0].mxu0
    %520 = vmatprep.mubr.f32.mxu0 0.0
    %521 = vmatmul.mubr.f32.gmra.mrb[0].mxu0 %v356
    %v522 = vpop.f32.mrb[0].mxu0
    %v523 = vadd.f32 0.0, %v522
    %v524 = vpop.f32.mrb[0].mxu0
    %525 = vmatprep.mubr.f32.mxu0 0.0
    %526 = vmatmul.mubr.f32.gmra.mrb[0].mxu0 %v357
    %v527 = vpop.f32.mrb[0].mxu0
    %v528 = vadd.f32 0.0, %v527
    %v529 = vpop.f32.mrb[0].mxu0
    %530 = vmatprep.mubr.f32.mxu0 0.0
    %531 = vmatmul.mubr.f32.gmra.mrb[0].mxu0 %v358
    %v532 = vpop.f32.mrb[0].mxu0
    %v533 = vadd.f32 0.0, %v532
    %v534 = vpop.f32.mrb[0].mxu0
    %535 = vdwg.mxu0
    %v536 = vld [vmem:[%s139] sm:$0xff]
    %v537 = vld [vmem:[%s139 + $0x8] sm:$0xff]
    %v538 = vld [vmem:[%s139 + $0x10] sm:$0xff]
    %v539 = vld [vmem:[%s139 + $0x18] sm:$0xff]
    %v540 = vld [vmem:[%s139 + $0x20] sm:$0xff]
    %v541 = vld [vmem:[%s139 + $0x28] sm:$0xff]
    %v542 = vld [vmem:[%s139 + $0x30] sm:$0xff]
    %v543 = vld [vmem:[%s139 + $0x38] sm:$0xff]
    %v544 = vld [vmem:[%s139 + $0x40] sm:$0xff]
    %v545 = vld [vmem:[%s139 + $0x48] sm:$0xff]
    %v546 = vld [vmem:[%s139 + $0x50] sm:$0xff]
    %v547 = vld [vmem:[%s139 + $0x58] sm:$0xff]
    %v548 = vld [vmem:[%s139 + $0x60] sm:$0xff]
    %v549 = vld [vmem:[%s139 + $0x68] sm:$0xff]
    %v550 = vld [vmem:[%s139 + $0x70] sm:$0xff]
    %v551 = vld [vmem:[%s139 + $0x78] sm:$0xff]
    %v552 = vld [vmem:[%s146] sm:$0x1]
    %v553 = vld [vmem:[%s146 + $0x1] sm:$0x1]
    %555 = vset.pattern.permute.xlu0 0
    %556 = vperm.xlu0 %555, %v536
    %v557 = vpop.permute.xlu0 %556
    %560 = vset.pattern.permute.xlu0 0
    %561 = vperm.xlu0 %560, %v537
    %v562 = vpop.permute.xlu0 %561
    %565 = vset.pattern.permute.xlu0 0
    %566 = vperm.xlu0 %565, %v538
    %v567 = vpop.permute.xlu0 %566
    %570 = vset.pattern.permute.xlu0 0
    %571 = vperm.xlu0 %570, %v539
    %v572 = vpop.permute.xlu0 %571
    %575 = vset.pattern.permute.xlu0 0
    %576 = vperm.xlu0 %575, %v540
    %v577 = vpop.permute.xlu0 %576
    %580 = vset.pattern.permute.xlu0 0
    %581 = vperm.xlu0 %580, %v541
    %v582 = vpop.permute.xlu0 %581
    %585 = vset.pattern.permute.xlu0 0
    %586 = vperm.xlu0 %585, %v542
    %v587 = vpop.permute.xlu0 %586
    %590 = vset.pattern.permute.xlu0 0
    %591 = vperm.xlu0 %590, %v543
    %v592 = vpop.permute.xlu0 %591
    %595 = vset.pattern.permute.xlu0 0
    %596 = vperm.xlu0 %595, %v544
    %v597 = vpop.permute.xlu0 %596
    %600 = vset.pattern.permute.xlu0 0
    %601 = vperm.xlu0 %600, %v545
    %v602 = vpop.permute.xlu0 %601
    %605 = vset.pattern.permute.xlu0 0
    %606 = vperm.xlu0 %605, %v546
    %v607 = vpop.permute.xlu0 %606
    %610 = vset.pattern.permute.xlu0 0
    %611 = vperm.xlu0 %610, %v547
    %v612 = vpop.permute.xlu0 %611
    %615 = vset.pattern.permute.xlu0 0
    %616 = vperm.xlu0 %615, %v548
    %v617 = vpop.permute.xlu0 %616
    %620 = vset.pattern.permute.xlu0 0
    %621 = vperm.xlu0 %620, %v549
    %v622 = vpop.permute.xlu0 %621
    %625 = vset.pattern.permute.xlu0 0
    %626 = vperm.xlu0 %625, %v550
    %v627 = vpop.permute.xlu0 %626
    %630 = vset.pattern.permute.xlu0 0
    %631 = vperm.xlu0 %630, %v551
    %v632 = vpop.permute.xlu0 %631
    %v634 = vlaneseq
    %v635 = vshrl.u32 %v634, 7
    %v636 = vsub.s32 0, %v635
    %v637 = vrot.slane %v552, %v636
    %v638 = vadd.f32 %v557, %v637
    %v639 = vadd.f32 %v562, %v637
    %v640 = vadd.f32 %v567, %v637
    %v641 = vadd.f32 %v572, %v637
    %v642 = vadd.f32 %v577, %v637
    %v643 = vadd.f32 %v582, %v637
    %v644 = vadd.f32 %v587, %v637
    %v645 = vadd.f32 %v592, %v637
    %v646 = vadd.f32 %v597, %v637
    %v647 = vadd.f32 %v602, %v637
    %v648 = vadd.f32 %v607, %v637
    %v649 = vadd.f32 %v612, %v637
    %v650 = vadd.f32 %v617, %v637
    %v651 = vadd.f32 %v622, %v637
    %v652 = vadd.f32 %v627, %v637
    %v653 = vadd.f32 %v632, %v637
    %v654 = vsub.f32 %v638, %v265
    %v655 = vsub.f32 %v639, %v270
    %v656 = vsub.f32 %v640, %v275
    %v657 = vsub.f32 %v641, %v280
    %v658 = vsub.f32 %v642, %v285
    %v659 = vsub.f32 %v643, %v290
    %v660 = vsub.f32 %v644, %v295
    %v661 = vsub.f32 %v645, %v300
    %v662 = vsub.f32 %v646, %v305
    %v663 = vsub.f32 %v647, %v310
    %v664 = vsub.f32 %v648, %v315
    %v665 = vsub.f32 %v649, %v320
    %v666 = vsub.f32 %v650, %v325
    %v667 = vsub.f32 %v651, %v330
    %v668 = vsub.f32 %v652, %v335
    %v669 = vsub.f32 %v653, %v340
    %v670 = vmax.f32 %v654, 1e-12
    %v671 = vmax.f32 %v655, 1e-12
    %v672 = vmax.f32 %v656, 1e-12
    %v673 = vmax.f32 %v657, 1e-12
    %v674 = vmax.f32 %v658, 1e-12
    %v675 = vmax.f32 %v659, 1e-12
    %v676 = vmax.f32 %v660, 1e-12
    %v677 = vmax.f32 %v661, 1e-12
    %v678 = vmax.f32 %v662, 1e-12
    %v679 = vmax.f32 %v663, 1e-12
    %v680 = vmax.f32 %v664, 1e-12
    %v681 = vmax.f32 %v665, 1e-12
    %v682 = vmax.f32 %v666, 1e-12
    %v683 = vmax.f32 %v667, 1e-12
    %v684 = vmax.f32 %v668, 1e-12
    %v685 = vmax.f32 %v669, 1e-12
    %v686 = vrsqrt.pop %v670
    %v687 = vmul.f32 %v670, %v686
    %vm688 = vcmp.eq.f32.partialorder %v670, inf
    %v689 = vsel %vm688, %v670, %v687
    %vm690 = vcmp.eq.f32.partialorder %v670, 0.0
    %v691 = vand.u32 %v670, 2147483648
    %v692 = vsel %vm690, %v691, %v689
    %v693 = vrsqrt.pop %v671
    %v694 = vmul.f32 %v671, %v693
    %vm695 = vcmp.eq.f32.partialorder %v671, inf
    %v696 = vsel %vm695, %v671, %v694
    %vm697 = vcmp.eq.f32.partialorder %v671, 0.0
    %v698 = vand.u32 %v671, 2147483648
    %v699 = vsel %vm697, %v698, %v696
    %v700 = vrsqrt.pop %v672
    %v701 = vmul.f32 %v672, %v700
    %vm702 = vcmp.eq.f32.partialorder %v672, inf
    %v703 = vsel %vm702, %v672, %v701
    %vm704 = vcmp.eq.f32.partialorder %v672, 0.0
    %v705 = vand.u32 %v672, 2147483648
    %v706 = vsel %vm704, %v705, %v703
    %v707 = vrsqrt.pop %v673
    %v708 = vmul.f32 %v673, %v707
    %vm709 = vcmp.eq.f32.partialorder %v673, inf
    %v710 = vsel %vm709, %v673, %v708
    %vm711 = vcmp.eq.f32.partialorder %v673, 0.0
    %v712 = vand.u32 %v673, 2147483648
    %v713 = vsel %vm711, %v712, %v710
    %v714 = vrsqrt.pop %v674
    %v715 = vmul.f32 %v674, %v714
    %vm716 = vcmp.eq.f32.partialorder %v674, inf
    %v717 = vsel %vm716, %v674, %v715
    %vm718 = vcmp.eq.f32.partialorder %v674, 0.0
    %v719 = vand.u32 %v674, 2147483648
    %v720 = vsel %vm718, %v719, %v717
    %v721 = vrsqrt.pop %v675
    %v722 = vmul.f32 %v675, %v721
    %vm723 = vcmp.eq.f32.partialorder %v675, inf
    %v724 = vsel %vm723, %v675, %v722
    %vm725 = vcmp.eq.f32.partialorder %v675, 0.0
    %v726 = vand.u32 %v675, 2147483648
    %v727 = vsel %vm725, %v726, %v724
    %v728 = vrsqrt.pop %v676
    %v729 = vmul.f32 %v676, %v728
    %vm730 = vcmp.eq.f32.partialorder %v676, inf
    %v731 = vsel %vm730, %v676, %v729
    %vm732 = vcmp.eq.f32.partialorder %v676, 0.0
    %v733 = vand.u32 %v676, 2147483648
    %v734 = vsel %vm732, %v733, %v731
    %v735 = vrsqrt.pop %v677
    %v736 = vmul.f32 %v677, %v735
    %vm737 = vcmp.eq.f32.partialorder %v677, inf
    %v738 = vsel %vm737, %v677, %v736
    %vm739 = vcmp.eq.f32.partialorder %v677, 0.0
    %v740 = vand.u32 %v677, 2147483648
    %v741 = vsel %vm739, %v740, %v738
    %v742 = vrsqrt.pop %v678
    %v743 = vmul.f32 %v678, %v742
    %vm744 = vcmp.eq.f32.partialorder %v678, inf
    %v745 = vsel %vm744, %v678, %v743
    %vm746 = vcmp.eq.f32.partialorder %v678, 0.0
    %v747 = vand.u32 %v678, 2147483648
    %v748 = vsel %vm746, %v747, %v745
    %v749 = vrsqrt.pop %v679
    %v750 = vmul.f32 %v679, %v749
    %vm751 = vcmp.eq.f32.partialorder %v679, inf
    %v752 = vsel %vm751, %v679, %v750
    %vm753 = vcmp.eq.f32.partialorder %v679, 0.0
    %v754 = vand.u32 %v679, 2147483648
    %v755 = vsel %vm753, %v754, %v752
    %v756 = vrsqrt.pop %v680
    %v757 = vmul.f32 %v680, %v756
    %vm758 = vcmp.eq.f32.partialorder %v680, inf
    %v759 = vsel %vm758, %v680, %v757
    %vm760 = vcmp.eq.f32.partialorder %v680, 0.0
    %v761 = vand.u32 %v680, 2147483648
    %v762 = vsel %vm760, %v761, %v759
    %v763 = vrsqrt.pop %v681
    %v764 = vmul.f32 %v681, %v763
    %vm765 = vcmp.eq.f32.partialorder %v681, inf
    %v766 = vsel %vm765, %v681, %v764
    %vm767 = vcmp.eq.f32.partialorder %v681, 0.0
    %v768 = vand.u32 %v681, 2147483648
    %v769 = vsel %vm767, %v768, %v766
    %v770 = vrsqrt.pop %v682
    %v771 = vmul.f32 %v682, %v770
    %vm772 = vcmp.eq.f32.partialorder %v682, inf
    %v773 = vsel %vm772, %v682, %v771
    %vm774 = vcmp.eq.f32.partialorder %v682, 0.0
    %v775 = vand.u32 %v682, 2147483648
    %v776 = vsel %vm774, %v775, %v773
    %v777 = vrsqrt.pop %v683
    %v778 = vmul.f32 %v683, %v777
    %vm779 = vcmp.eq.f32.partialorder %v683, inf
    %v780 = vsel %vm779, %v683, %v778
    %vm781 = vcmp.eq.f32.partialorder %v683, 0.0
    %v782 = vand.u32 %v683, 2147483648
    %v783 = vsel %vm781, %v782, %v780
    %v784 = vrsqrt.pop %v684
    %v785 = vmul.f32 %v684, %v784
    %vm786 = vcmp.eq.f32.partialorder %v684, inf
    %v787 = vsel %vm786, %v684, %v785
    %vm788 = vcmp.eq.f32.partialorder %v684, 0.0
    %v789 = vand.u32 %v684, 2147483648
    %v790 = vsel %vm788, %v789, %v787
    %v791 = vrsqrt.pop %v685
    %v792 = vmul.f32 %v685, %v791
    %vm793 = vcmp.eq.f32.partialorder %v685, inf
    %v794 = vsel %vm793, %v685, %v792
    %vm795 = vcmp.eq.f32.partialorder %v685, 0.0
    %v796 = vand.u32 %v685, 2147483648
    %v797 = vsel %vm795, %v796, %v794
    %798 = vset.pattern.permute.xlu0 1
    %799 = vperm.xlu0 %798, %v536
    %v800 = vpop.permute.xlu0 %799
    %802 = vset.pattern.permute.xlu0 1
    %803 = vperm.xlu0 %802, %v537
    %v804 = vpop.permute.xlu0 %803
    %806 = vset.pattern.permute.xlu0 1
    %807 = vperm.xlu0 %806, %v538
    %v808 = vpop.permute.xlu0 %807
    %810 = vset.pattern.permute.xlu0 1
    %811 = vperm.xlu0 %810, %v539
    %v812 = vpop.permute.xlu0 %811
    %814 = vset.pattern.permute.xlu0 1
    %815 = vperm.xlu0 %814, %v540
    %v816 = vpop.permute.xlu0 %815
    %818 = vset.pattern.permute.xlu0 1
    %819 = vperm.xlu0 %818, %v541
    %v820 = vpop.permute.xlu0 %819
    %822 = vset.pattern.permute.xlu0 1
    %823 = vperm.xlu0 %822, %v542
    %v824 = vpop.permute.xlu0 %823
    %826 = vset.pattern.permute.xlu0 1
    %827 = vperm.xlu0 %826, %v543
    %v828 = vpop.permute.xlu0 %827
    %830 = vset.pattern.permute.xlu0 1
    %831 = vperm.xlu0 %830, %v544
    %v832 = vpop.permute.xlu0 %831
    %834 = vset.pattern.permute.xlu0 1
    %835 = vperm.xlu0 %834, %v545
    %v836 = vpop.permute.xlu0 %835
    %838 = vset.pattern.permute.xlu0 1
    %839 = vperm.xlu0 %838, %v546
    %v840 = vpop.permute.xlu0 %839
    %842 = vset.pattern.permute.xlu0 1
    %843 = vperm.xlu0 %842, %v547
    %v844 = vpop.permute.xlu0 %843
    %846 = vset.pattern.permute.xlu0 1
    %847 = vperm.xlu0 %846, %v548
    %v848 = vpop.permute.xlu0 %847
    %850 = vset.pattern.permute.xlu0 1
    %851 = vperm.xlu0 %850, %v549
    %v852 = vpop.permute.xlu0 %851
    %854 = vset.pattern.permute.xlu0 1
    %855 = vperm.xlu0 %854, %v550
    %v856 = vpop.permute.xlu0 %855
    %858 = vset.pattern.permute.xlu0 1
    %859 = vperm.xlu0 %858, %v551
    %v860 = vpop.permute.xlu0 %859
    %v862 = vlaneseq
    %v863 = vshrl.u32 %v862, 7
    %v864 = vsub.s32 0, %v863
    %v865 = vrot.slane %v553, %v864
    %v866 = vadd.f32 %v800, %v865
    %v867 = vadd.f32 %v804, %v865
    %v868 = vadd.f32 %v808, %v865
    %v869 = vadd.f32 %v812, %v865
    %v870 = vadd.f32 %v816, %v865
    %v871 = vadd.f32 %v820, %v865
    %v872 = vadd.f32 %v824, %v865
    %v873 = vadd.f32 %v828, %v865
    %v874 = vadd.f32 %v832, %v865
    %v875 = vadd.f32 %v836, %v865
    %v876 = vadd.f32 %v840, %v865
    %v877 = vadd.f32 %v844, %v865
    %v878 = vadd.f32 %v848, %v865
    %v879 = vadd.f32 %v852, %v865
    %v880 = vadd.f32 %v856, %v865
    %v881 = vadd.f32 %v860, %v865
    %v882 = vsub.f32 %v866, %v458
    %v883 = vsub.f32 %v867, %v463
    %v884 = vsub.f32 %v868, %v468
    %v885 = vsub.f32 %v869, %v473
    %v886 = vsub.f32 %v870, %v478
    %v887 = vsub.f32 %v871, %v483
    %v888 = vsub.f32 %v872, %v488
    %v889 = vsub.f32 %v873, %v493
    %v890 = vsub.f32 %v874, %v498
    %v891 = vsub.f32 %v875, %v503
    %v892 = vsub.f32 %v876, %v508
    %v893 = vsub.f32 %v877, %v513
    %v894 = vsub.f32 %v878, %v518
    %v895 = vsub.f32 %v879, %v523
    %v896 = vsub.f32 %v880, %v528
    %v897 = vsub.f32 %v881, %v533
    %v898 = vmax.f32 %v882, 1e-12
    %v899 = vmax.f32 %v883, 1e-12
    %v900 = vmax.f32 %v884, 1e-12
    %v901 = vmax.f32 %v885, 1e-12
    %v902 = vmax.f32 %v886, 1e-12
    %v903 = vmax.f32 %v887, 1e-12
    %v904 = vmax.f32 %v888, 1e-12
    %v905 = vmax.f32 %v889, 1e-12
    %v906 = vmax.f32 %v890, 1e-12
    %v907 = vmax.f32 %v891, 1e-12
    %v908 = vmax.f32 %v892, 1e-12
    %v909 = vmax.f32 %v893, 1e-12
    %v910 = vmax.f32 %v894, 1e-12
    %v911 = vmax.f32 %v895, 1e-12
    %v912 = vmax.f32 %v896, 1e-12
    %v913 = vmax.f32 %v897, 1e-12
    %v914 = vrsqrt.pop %v898
    %v915 = vmul.f32 %v898, %v914
    %vm916 = vcmp.eq.f32.partialorder %v898, inf
    %v917 = vsel %vm916, %v898, %v915
    %vm918 = vcmp.eq.f32.partialorder %v898, 0.0
    %v919 = vand.u32 %v898, 2147483648
    %v920 = vsel %vm918, %v919, %v917
    %v921 = vrsqrt.pop %v899
    %v922 = vmul.f32 %v899, %v921
    %vm923 = vcmp.eq.f32.partialorder %v899, inf
    %v924 = vsel %vm923, %v899, %v922
    %vm925 = vcmp.eq.f32.partialorder %v899, 0.0
    %v926 = vand.u32 %v899, 2147483648
    %v927 = vsel %vm925, %v926, %v924
    %v928 = vrsqrt.pop %v900
    %v929 = vmul.f32 %v900, %v928
    %vm930 = vcmp.eq.f32.partialorder %v900, inf
    %v931 = vsel %vm930, %v900, %v929
    %vm932 = vcmp.eq.f32.partialorder %v900, 0.0
    %v933 = vand.u32 %v900, 2147483648
    %v934 = vsel %vm932, %v933, %v931
    %v935 = vrsqrt.pop %v901
    %v936 = vmul.f32 %v901, %v935
    %vm937 = vcmp.eq.f32.partialorder %v901, inf
    %v938 = vsel %vm937, %v901, %v936
    %vm939 = vcmp.eq.f32.partialorder %v901, 0.0
    %v940 = vand.u32 %v901, 2147483648
    %v941 = vsel %vm939, %v940, %v938
    %v942 = vrsqrt.pop %v902
    %v943 = vmul.f32 %v902, %v942
    %vm944 = vcmp.eq.f32.partialorder %v902, inf
    %v945 = vsel %vm944, %v902, %v943
    %vm946 = vcmp.eq.f32.partialorder %v902, 0.0
    %v947 = vand.u32 %v902, 2147483648
    %v948 = vsel %vm946, %v947, %v945
    %v949 = vrsqrt.pop %v903
    %v950 = vmul.f32 %v903, %v949
    %vm951 = vcmp.eq.f32.partialorder %v903, inf
    %v952 = vsel %vm951, %v903, %v950
    %vm953 = vcmp.eq.f32.partialorder %v903, 0.0
    %v954 = vand.u32 %v903, 2147483648
    %v955 = vsel %vm953, %v954, %v952
    %v956 = vrsqrt.pop %v904
    %v957 = vmul.f32 %v904, %v956
    %vm958 = vcmp.eq.f32.partialorder %v904, inf
    %v959 = vsel %vm958, %v904, %v957
    %vm960 = vcmp.eq.f32.partialorder %v904, 0.0
    %v961 = vand.u32 %v904, 2147483648
    %v962 = vsel %vm960, %v961, %v959
    %v963 = vrsqrt.pop %v905
    %v964 = vmul.f32 %v905, %v963
    %vm965 = vcmp.eq.f32.partialorder %v905, inf
    %v966 = vsel %vm965, %v905, %v964
    %vm967 = vcmp.eq.f32.partialorder %v905, 0.0
    %v968 = vand.u32 %v905, 2147483648
    %v969 = vsel %vm967, %v968, %v966
    %v970 = vrsqrt.pop %v906
    %v971 = vmul.f32 %v906, %v970
    %vm972 = vcmp.eq.f32.partialorder %v906, inf
    %v973 = vsel %vm972, %v906, %v971
    %vm974 = vcmp.eq.f32.partialorder %v906, 0.0
    %v975 = vand.u32 %v906, 2147483648
    %v976 = vsel %vm974, %v975, %v973
    %v977 = vrsqrt.pop %v907
    %v978 = vmul.f32 %v907, %v977
    %vm979 = vcmp.eq.f32.partialorder %v907, inf
    %v980 = vsel %vm979, %v907, %v978
    %vm981 = vcmp.eq.f32.partialorder %v907, 0.0
    %v982 = vand.u32 %v907, 2147483648
    %v983 = vsel %vm981, %v982, %v980
    %v984 = vrsqrt.pop %v908
    %v985 = vmul.f32 %v908, %v984
    %vm986 = vcmp.eq.f32.partialorder %v908, inf
    %v987 = vsel %vm986, %v908, %v985
    %vm988 = vcmp.eq.f32.partialorder %v908, 0.0
    %v989 = vand.u32 %v908, 2147483648
    %v990 = vsel %vm988, %v989, %v987
    %v991 = vrsqrt.pop %v909
    %v992 = vmul.f32 %v909, %v991
    %vm993 = vcmp.eq.f32.partialorder %v909, inf
    %v994 = vsel %vm993, %v909, %v992
    %vm995 = vcmp.eq.f32.partialorder %v909, 0.0
    %v996 = vand.u32 %v909, 2147483648
    %v997 = vsel %vm995, %v996, %v994
    %v998 = vrsqrt.pop %v910
    %v999 = vmul.f32 %v910, %v998
    %vm1000 = vcmp.eq.f32.partialorder %v910, inf
    %v1001 = vsel %vm1000, %v910, %v999
    %vm1002 = vcmp.eq.f32.partialorder %v910, 0.0
    %v1003 = vand.u32 %v910, 2147483648
    %v1004 = vsel %vm1002, %v1003, %v1001
    %v1005 = vrsqrt.pop %v911
    %v1006 = vmul.f32 %v911, %v1005
    %vm1007 = vcmp.eq.f32.partialorder %v911, inf
    %v1008 = vsel %vm1007, %v911, %v1006
    %vm1009 = vcmp.eq.f32.partialorder %v911, 0.0
    %v1010 = vand.u32 %v911, 2147483648
    %v1011 = vsel %vm1009, %v1010, %v1008
    %v1012 = vrsqrt.pop %v912
    %v1013 = vmul.f32 %v912, %v1012
    %vm1014 = vcmp.eq.f32.partialorder %v912, inf
    %v1015 = vsel %vm1014, %v912, %v1013
    %vm1016 = vcmp.eq.f32.partialorder %v912, 0.0
    %v1017 = vand.u32 %v912, 2147483648
    %v1018 = vsel %vm1016, %v1017, %v1015
    %v1019 = vrsqrt.pop %v913
    %v1020 = vmul.f32 %v913, %v1019
    %vm1021 = vcmp.eq.f32.partialorder %v913, inf
    %v1022 = vsel %vm1021, %v913, %v1020
    %vm1023 = vcmp.eq.f32.partialorder %v913, 0.0
    %v1024 = vand.u32 %v913, 2147483648
    %v1025 = vsel %vm1023, %v1024, %v1022
    %v1026 = vsub.f32 %v692, %v920
    %v1027 = vsub.f32 %v699, %v927
    %v1028 = vsub.f32 %v706, %v934
    %v1029 = vsub.f32 %v713, %v941
    %v1030 = vsub.f32 %v720, %v948
    %v1031 = vsub.f32 %v727, %v955
    %v1032 = vsub.f32 %v734, %v962
    %v1033 = vsub.f32 %v741, %v969
    %v1034 = vsub.f32 %v748, %v976
    %v1035 = vsub.f32 %v755, %v983
    %v1036 = vsub.f32 %v762, %v990
    %v1037 = vsub.f32 %v769, %v997
    %v1038 = vsub.f32 %v776, %v1004
    %v1039 = vsub.f32 %v783, %v1011
    %v1040 = vsub.f32 %v790, %v1018
    %v1041 = vsub.f32 %v797, %v1025
    %v1042 = vand.u32 2147483647, %v1026
    %v1043 = vand.u32 2147483647, %v1027
    %v1044 = vand.u32 2147483647, %v1028
    %v1045 = vand.u32 2147483647, %v1029
    %v1046 = vand.u32 2147483647, %v1030
    %v1047 = vand.u32 2147483647, %v1031
    %v1048 = vand.u32 2147483647, %v1032
    %v1049 = vand.u32 2147483647, %v1033
    %v1050 = vand.u32 2147483647, %v1034
    %v1051 = vand.u32 2147483647, %v1035
    %v1052 = vand.u32 2147483647, %v1036
    %v1053 = vand.u32 2147483647, %v1037
    %v1054 = vand.u32 2147483647, %v1038
    %v1055 = vand.u32 2147483647, %v1039
    %v1056 = vand.u32 2147483647, %v1040
    %v1057 = vand.u32 2147483647, %v1041
    %vm1058 = vcmp.lt.f32.partialorder %v1042, 1.0
    %vm1059 = vcmp.lt.f32.partialorder %v1043, 1.0
    %vm1060 = vcmp.lt.f32.partialorder %v1044, 1.0
    %vm1061 = vcmp.lt.f32.partialorder %v1045, 1.0
    %vm1062 = vcmp.lt.f32.partialorder %v1046, 1.0
    %vm1063 = vcmp.lt.f32.partialorder %v1047, 1.0
    %vm1064 = vcmp.lt.f32.partialorder %v1048, 1.0
    %vm1065 = vcmp.lt.f32.partialorder %v1049, 1.0
    %vm1066 = vcmp.lt.f32.partialorder %v1050, 1.0
    %vm1067 = vcmp.lt.f32.partialorder %v1051, 1.0
    %vm1068 = vcmp.lt.f32.partialorder %v1052, 1.0
    %vm1069 = vcmp.lt.f32.partialorder %v1053, 1.0
    %vm1070 = vcmp.lt.f32.partialorder %v1054, 1.0
    %vm1071 = vcmp.lt.f32.partialorder %v1055, 1.0
    %vm1072 = vcmp.lt.f32.partialorder %v1056, 1.0
    %vm1073 = vcmp.lt.f32.partialorder %v1057, 1.0
    %v1074 = vmul.f32 %v1026, 0.5
    %v1075 = vmul.f32 %v1027, 0.5
    %v1076 = vmul.f32 %v1028, 0.5
    %v1077 = vmul.f32 %v1029, 0.5
    %v1078 = vmul.f32 %v1030, 0.5
    %v1079 = vmul.f32 %v1031, 0.5
    %v1080 = vmul.f32 %v1032, 0.5
    %v1081 = vmul.f32 %v1033, 0.5
    %v1082 = vmul.f32 %v1034, 0.5
    %v1083 = vmul.f32 %v1035, 0.5
    %v1084 = vmul.f32 %v1036, 0.5
    %v1085 = vmul.f32 %v1037, 0.5
    %v1086 = vmul.f32 %v1038, 0.5
    %v1087 = vmul.f32 %v1039, 0.5
    %v1088 = vmul.f32 %v1040, 0.5
    %v1089 = vmul.f32 %v1041, 0.5
    %v1090 = vmul.f32 %v1074, %v1026
    %v1091 = vmul.f32 %v1075, %v1027
    %v1092 = vmul.f32 %v1076, %v1028
    %v1093 = vmul.f32 %v1077, %v1029
    %v1094 = vmul.f32 %v1078, %v1030
    %v1095 = vmul.f32 %v1079, %v1031
    %v1096 = vmul.f32 %v1080, %v1032
    %v1097 = vmul.f32 %v1081, %v1033
    %v1098 = vmul.f32 %v1082, %v1034
    %v1099 = vmul.f32 %v1083, %v1035
    %v1100 = vmul.f32 %v1084, %v1036
    %v1101 = vmul.f32 %v1085, %v1037
    %v1102 = vmul.f32 %v1086, %v1038
    %v1103 = vmul.f32 %v1087, %v1039
    %v1104 = vmul.f32 %v1088, %v1040
    %v1105 = vmul.f32 %v1089, %v1041
    %v1106 = vsub.f32 %v1042, 0.5
    %v1107 = vsub.f32 %v1043, 0.5
    %v1108 = vsub.f32 %v1044, 0.5
    %v1109 = vsub.f32 %v1045, 0.5
    %v1110 = vsub.f32 %v1046, 0.5
    %v1111 = vsub.f32 %v1047, 0.5
    %v1112 = vsub.f32 %v1048, 0.5
    %v1113 = vsub.f32 %v1049, 0.5
    %v1114 = vsub.f32 %v1050, 0.5
    %v1115 = vsub.f32 %v1051, 0.5
    %v1116 = vsub.f32 %v1052, 0.5
    %v1117 = vsub.f32 %v1053, 0.5
    %v1118 = vsub.f32 %v1054, 0.5
    %v1119 = vsub.f32 %v1055, 0.5
    %v1120 = vsub.f32 %v1056, 0.5
    %v1121 = vsub.f32 %v1057, 0.5
    %v1122 = vsel %vm1058, %v1090, %v1106
    %v1123 = vsel %vm1059, %v1091, %v1107
    %v1124 = vsel %vm1060, %v1092, %v1108
    %v1125 = vsel %vm1061, %v1093, %v1109
    %v1126 = vsel %vm1062, %v1094, %v1110
    %v1127 = vsel %vm1063, %v1095, %v1111
    %v1128 = vsel %vm1064, %v1096, %v1112
    %v1129 = vsel %vm1065, %v1097, %v1113
    %v1130 = vsel %vm1066, %v1098, %v1114
    %v1131 = vsel %vm1067, %v1099, %v1115
    %v1132 = vsel %vm1068, %v1100, %v1116
    %v1133 = vsel %vm1069, %v1101, %v1117
    %v1134 = vsel %vm1070, %v1102, %v1118
    %v1135 = vsel %vm1071, %v1103, %v1119
    %v1136 = vsel %vm1072, %v1104, %v1120
    %v1137 = vsel %vm1073, %v1105, %v1121
    %p1138 = scmp.eq.s32.totalorder %s148, %s149
    %s1139 = scalar_select %p1138, 1.0, 2.0
    %p1140 = scmp.eq.s32.totalorder %s148, 0
    %p1141 = por %p1138, %p1140
    %p1142 = scmp.eq.s32.totalorder %s149, 0
    %p1143 = por %p1141, %p1142
    // Predicated region
    $region38: #{tpu_custom_call.1} parent=1 // pred_check
      %p1144 = pneg %p1143
    $region39: #{tpu_custom_call.1} parent=1 // pred_check_branch
      %1146 = sbr.rel (%p1144) target = $region41
    $region40: #{tpu_custom_call.1} parent=1 // pred_region
      %s1147 = smul.u32 %s148, 128
      %v1148 = vlaneseq
      %v1149 = vshrl.u32 %v1148, 7
      %v1150 = vadd.s32 %v1149, 8
      %v1151 = vadd.s32 %v1149, 16
      %v1152 = vadd.s32 %v1149, 24
      %v1153 = vadd.s32 %v1149, 32
      %v1154 = vadd.s32 %v1149, 40
      %v1155 = vadd.s32 %v1149, 48
      %v1156 = vadd.s32 %v1149, 56
      %v1157 = vadd.s32 %v1149, 64
      %v1158 = vadd.s32 %v1149, 72
      %v1159 = vadd.s32 %v1149, 80
      %v1160 = vadd.s32 %v1149, 88
      %v1161 = vadd.s32 %v1149, 96
      %v1162 = vadd.s32 %v1149, 104
      %v1163 = vadd.s32 %v1149, 112
      %v1164 = vadd.s32 %v1149, 120
      %v1165 = vstv %s1147
      %v1166 = vadd.s32 %v1165, %v1149
      %v1167 = vadd.s32 %v1165, %v1150
      %v1168 = vadd.s32 %v1165, %v1151
      %v1169 = vadd.s32 %v1165, %v1152
      %v1170 = vadd.s32 %v1165, %v1153
      %v1171 = vadd.s32 %v1165, %v1154
      %v1172 = vadd.s32 %v1165, %v1155
      %v1173 = vadd.s32 %v1165, %v1156
      %v1174 = vadd.s32 %v1165, %v1157
      %v1175 = vadd.s32 %v1165, %v1158
      %v1176 = vadd.s32 %v1165, %v1159
      %v1177 = vadd.s32 %v1165, %v1160
      %v1178 = vadd.s32 %v1165, %v1161
      %v1179 = vadd.s32 %v1165, %v1162
      %v1180 = vadd.s32 %v1165, %v1163
      %v1181 = vadd.s32 %v1165, %v1164
      %s1182 = smul.u32 %s149, 128
      %v1183 = vlaneseq
      %v1184 = vand.u32 %v1183, 127
      %v1185 = vstv %s1182
      %v1186 = vadd.s32 %v1185, %v1184
      %vm1187 = vcmp.ne.s32.totalorder %v1166, %v1186
      %vm1188 = vcmp.ne.s32.totalorder %v1167, %v1186
      %vm1189 = vcmp.ne.s32.totalorder %v1168, %v1186
      %vm1190 = vcmp.ne.s32.totalorder %v1169, %v1186
      %vm1191 = vcmp.ne.s32.totalorder %v1170, %v1186
      %vm1192 = vcmp.ne.s32.totalorder %v1171, %v1186
      %vm1193 = vcmp.ne.s32.totalorder %v1172, %v1186
      %vm1194 = vcmp.ne.s32.totalorder %v1173, %v1186
      %vm1195 = vcmp.ne.s32.totalorder %v1174, %v1186
      %vm1196 = vcmp.ne.s32.totalorder %v1175, %v1186
      %vm1197 = vcmp.ne.s32.totalorder %v1176, %v1186
      %vm1198 = vcmp.ne.s32.totalorder %v1177, %v1186
      %vm1199 = vcmp.ne.s32.totalorder %v1178, %v1186
      %vm1200 = vcmp.ne.s32.totalorder %v1179, %v1186
      %vm1201 = vcmp.ne.s32.totalorder %v1180, %v1186
      %vm1202 = vcmp.ne.s32.totalorder %v1181, %v1186
      %vm1203 = vcmp.lt.s32.totalorder %v1166, 8
      %vm1204 = vcmp.lt.s32.totalorder %v1167, 8
      %vm1205 = vcmp.lt.s32.totalorder %v1168, 8
      %vm1206 = vcmp.lt.s32.totalorder %v1169, 8
      %vm1207 = vcmp.lt.s32.totalorder %v1170, 8
      %vm1208 = vcmp.lt.s32.totalorder %v1171, 8
      %vm1209 = vcmp.lt.s32.totalorder %v1172, 8
      %vm1210 = vcmp.lt.s32.totalorder %v1173, 8
      %vm1211 = vcmp.lt.s32.totalorder %v1174, 8
      %vm1212 = vcmp.lt.s32.totalorder %v1175, 8
      %vm1213 = vcmp.lt.s32.totalorder %v1176, 8
      %vm1214 = vcmp.lt.s32.totalorder %v1177, 8
      %vm1215 = vcmp.lt.s32.totalorder %v1178, 8
      %vm1216 = vcmp.lt.s32.totalorder %v1179, 8
      %vm1217 = vcmp.lt.s32.totalorder %v1180, 8
      %vm1218 = vcmp.lt.s32.totalorder %v1181, 8
      %vm1219 = vmand %vm1187, %vm1203
      %vm1220 = vmand %vm1188, %vm1204
      %vm1221 = vmand %vm1189, %vm1205
      %vm1222 = vmand %vm1190, %vm1206
      %vm1223 = vmand %vm1191, %vm1207
      %vm1224 = vmand %vm1192, %vm1208
      %vm1225 = vmand %vm1193, %vm1209
      %vm1226 = vmand %vm1194, %vm1210
      %vm1227 = vmand %vm1195, %vm1211
      %vm1228 = vmand %vm1196, %vm1212
      %vm1229 = vmand %vm1197, %vm1213
      %vm1230 = vmand %vm1198, %vm1214
      %vm1231 = vmand %vm1199, %vm1215
      %vm1232 = vmand %vm1200, %vm1216
      %vm1233 = vmand %vm1201, %vm1217
      %vm1234 = vmand %vm1202, %vm1218
      %vm1235 = vcmp.lt.s32.totalorder %v1186, 8
      %vm1236 = vmand %vm1219, %vm1235
      %vm1237 = vmand %vm1220, %vm1235
      %vm1238 = vmand %vm1221, %vm1235
      %vm1239 = vmand %vm1222, %vm1235
      %vm1240 = vmand %vm1223, %vm1235
      %vm1241 = vmand %vm1224, %vm1235
      %vm1242 = vmand %vm1225, %vm1235
      %vm1243 = vmand %vm1226, %vm1235
      %vm1244 = vmand %vm1227, %vm1235
      %vm1245 = vmand %vm1228, %vm1235
      %vm1246 = vmand %vm1229, %vm1235
      %vm1247 = vmand %vm1230, %vm1235
      %vm1248 = vmand %vm1231, %vm1235
      %vm1249 = vmand %vm1232, %vm1235
      %vm1250 = vmand %vm1233, %vm1235
      %vm1251 = vmand %vm1234, %vm1235
      %v1252 = vsel %vm1236, %v1122, 0.0
      %v1253 = vsel %vm1237, %v1123, 0.0
      %v1254 = vsel %vm1238, %v1124, 0.0
      %v1255 = vsel %vm1239, %v1125, 0.0
      %v1256 = vsel %vm1240, %v1126, 0.0
      %v1257 = vsel %vm1241, %v1127, 0.0
      %v1258 = vsel %vm1242, %v1128, 0.0
      %v1259 = vsel %vm1243, %v1129, 0.0
      %v1260 = vsel %vm1244, %v1130, 0.0
      %v1261 = vsel %vm1245, %v1131, 0.0
      %v1262 = vsel %vm1246, %v1132, 0.0
      %v1263 = vsel %vm1247, %v1133, 0.0
      %v1264 = vsel %vm1248, %v1134, 0.0
      %v1265 = vsel %vm1249, %v1135, 0.0
      %v1266 = vsel %vm1250, %v1136, 0.0
      %v1267 = vsel %vm1251, %v1137, 0.0
      %v1268 = vadd.f32 %v1252, %v1253
      %v1269 = vadd.f32 %v1268, %v1254
      %v1270 = vadd.f32 %v1269, %v1255
      %v1271 = vadd.f32 %v1270, %v1256
      %v1272 = vadd.f32 %v1271, %v1257
      %v1273 = vadd.f32 %v1272, %v1258
      %v1274 = vadd.f32 %v1273, %v1259
      %v1275 = vadd.f32 %v1274, %v1260
      %v1276 = vadd.f32 %v1275, %v1261
      %v1277 = vadd.f32 %v1276, %v1262
      %v1278 = vadd.f32 %v1277, %v1263
      %v1279 = vadd.f32 %v1278, %v1264
      %v1280 = vadd.f32 %v1279, %v1265
      %v1281 = vadd.f32 %v1280, %v1266
      %v1282 = vadd.f32 %v1281, %v1267
      %v1283 = vstv %s1139
      %v1284 = vmul.f32 %v1283, %v1282
      %1285 = vst [vmem:[#allocation11] sm:$0xff] %v1284
    $region41: #{tpu_custom_call.1} parent=1 // pred_fallthru
      _
    %p1286 = pneg %p1143
    // Predicated region
    $region42: #{tpu_custom_call.1} parent=1 // pred_check
      _
    $region43: #{tpu_custom_call.1} parent=1 // pred_check_branch
      %1288 = sbr.rel (%p1143) target = $region45
    $region44: #{tpu_custom_call.1} parent=1 // pred_region
      %v1289 = vadd.f32 %v1122, %v1123
      %v1290 = vadd.f32 %v1289, %v1124
      %v1291 = vadd.f32 %v1290, %v1125
      %v1292 = vadd.f32 %v1291, %v1126
      %v1293 = vadd.f32 %v1292, %v1127
      %v1294 = vadd.f32 %v1293, %v1128
      %v1295 = vadd.f32 %v1294, %v1129
      %v1296 = vadd.f32 %v1295, %v1130
      %v1297 = vadd.f32 %v1296, %v1131
      %v1298 = vadd.f32 %v1297, %v1132
      %v1299 = vadd.f32 %v1298, %v1133
      %v1300 = vadd.f32 %v1299, %v1134
      %v1301 = vadd.f32 %v1300, %v1135
      %v1302 = vadd.f32 %v1301, %v1136
      %v1303 = vadd.f32 %v1302, %v1137
      %v1304 = vstv %s1139
      %v1305 = vmul.f32 %v1304, %v1303
      %1306 = vst [vmem:[#allocation11] sm:$0xff] %v1305
    $region45: #{tpu_custom_call.1} parent=1 // pred_fallthru
      _
    // Predicated region
    $region46: #{tpu_custom_call.1} parent=1 // pred_check
      _
    $region47: #{tpu_custom_call.1} parent=1 // pred_check_branch
      %1308 = sbr.rel (0) target = $region49
    $region48: #{tpu_custom_call.1} parent=1 // pred_region
      %s1310 = ssub.s32 128, 128
      %1311 = vsyncadd [#allocation7], %s1310
      %s1313 = sshll.u32 [#allocation11], 4
      %s1314 = int_to_ptr.vmem [resolvable:$true] %s1313
      %1316 = dma.vmem_to_hbm [thread:$0]  %s1314, 128, %s8, [#allocation7]
    $region49: #{tpu_custom_call.1} parent=1 // pred_fallthru
      _
    // Predicated region
    $region50: #{tpu_custom_call.1} parent=1 // pred_check
      _
    $region51: #{tpu_custom_call.1} parent=1 // pred_check_branch
      %1318 = sbr.rel (0) target = $region53
    $region52: #{tpu_custom_call.1} parent=1 // pred_region
      %1319 = dma.done [#allocation7], 128
    $region53: #{tpu_custom_call.1} parent=1 // pred_fallthru
      _
    %1320 = vsyncpa [#allocation6], 1
    %1321 = vsyncpa [#allocation9], 1
    %1322 = vsyncpa [#allocation7], 1

</llo_original>
